<compile_context>
chip_gen: v5e
topology: v5e:2x2
jax: 0.10.0
libtpu: 0.0.40
codegen_flags: <defaults>
</compile_context>

<pallas_src>
import functools
import numpy as np
import jax
import jax.numpy as jnp
from jax.experimental import pallas as pl
from jax.experimental.pallas import tpu as pltpu


# ------------------------------ fused kernel --------------------------------

def _gtransformer_kernel(ent_ref, rel_ref, elab_ref,
                         w_ent_ref, w_rel_ref, w_out_ref,
                         w_res_ent_ref, w_res_rel_ref,
                         attn_ht_ref, ar_bd_ref,
                         ffn_w1_ref, ffn_b1_ref, ffn_w2_ref, ffn_b2_ref,
                         ent_out_ref, rel_out_ref,
                         feat_pp, feat0_scr, scores_scr, er_scr, *,
                         num_heads, att_dim, num_rel, block_rows,
                         alpha, hop_num, negative_slope,
                         rw_ent1, rw_ent2, rw_rel):
    h = pl.program_id(0)        # 0 = init pass, 1..hop_num = PPR hops
    t = pl.program_id(1)        # destination-row tile
    H, Dh, Tv = num_heads, att_dim, block_rows
    row0 = pl.multiple_of(t * Tv, Tv)

    # ------------------------- init pass (h == 0) ---------------------------
    @pl.when(h == 0)
    def _init():
        ent_tile = ent_ref[...]                                    # (Tv, Fe)
        feat0_tile = jnp.dot(ent_tile, w_ent_ref[...],
                             preferred_element_type=jnp.float32)   # (Tv, out)
        feat0_scr[pl.ds(row0, Tv), :] = feat0_tile
        feat_pp[0, pl.ds(row0, Tv), :] = feat0_tile
        # [EH | ET] per-head scores from one fused projection (out, 2H)
        scores_scr[pl.ds(row0, Tv), :] = jnp.dot(
            feat0_tile, attn_ht_ref[...], preferred_element_type=jnp.float32)

        @pl.when(t == 0)
        def _rel_scores():
            rel_feat = jnp.dot(rel_ref[...], w_rel_ref[...],
                               preferred_element_type=jnp.float32)  # (R, out)
            er_scr[...] = jnp.dot(rel_feat, ar_bd_ref[...],
                                  preferred_element_type=jnp.float32)  # (R, H)

    # --------------------------- PPR hop (h >= 1) ----------------------------
    @pl.when(h > 0)
    def _hop():
        prev_slot = (h + 1) & 1          # ping-pong feat buffer
        new_slot = h & 1
        e_lab = elab_ref[...]                                     # (Tv, N) int32
        edge_mask = e_lab >= 0           # adjacency derived from labels

        feat_prev = feat_pp[prev_slot]                            # (N, out)
        feat0_tile = feat0_scr[pl.ds(row0, Tv), :]                # (Tv, out)
        scores_all = scores_scr[...]                              # (N, 2H)
        scores_tile = scores_scr[pl.ds(row0, Tv), :]              # (Tv, 2H)
        EH_T = scores_all[:, 0:H].T                               # (H, N) source
        ET_tile = scores_tile[:, H:2 * H]                         # (Tv, H) dest
        ER = er_scr[...]                                          # (R, H)

        # relation-score gather: masks hoisted once per step, reused per head.
        # TODO(synk): replace with a one-hot MXU matmul (review item #1).
        rel_masks = [(e_lab == r).astype(jnp.float32) for r in range(num_rel)]

        neg_big = jnp.float32(-1e9)
        slope = jnp.float32(negative_slope)
        one_m_a = jnp.float32(1.0 - alpha)
        a_c = jnp.float32(alpha)

        head_blocks = []
        for hh in range(H):
            lo = hh * Dh
            er_h = rel_masks[0] * ER[0:1, hh:hh + 1]
            for r in range(1, num_rel):
                er_h = er_h + rel_masks[r] * ER[r:r + 1, hh:hh + 1]    # (Tv, N)

            logits = EH_T[hh:hh + 1, :] + ET_tile[:, hh:hh + 1] + er_h
            logits = jnp.where(logits >= 0.0, logits, slope * logits)  # leaky relu

            # dense edge_softmax over incoming edges u of destination v
            masked = jnp.where(edge_mask, logits, neg_big)
            m = jnp.max(masked, axis=-1, keepdims=True)
            p = jnp.where(edge_mask, jnp.exp(masked - m), 0.0)
            denom = jnp.sum(p, axis=-1, keepdims=True)
            denom = jnp.where(denom > 0.0, denom, 1.0)   # zero in-degree guard
            a_h = p / denom                                            # (Tv, N)

            agg = jnp.dot(a_h, feat_prev[:, lo:lo + Dh],
                          preferred_element_type=jnp.float32)          # (Tv, Dh)
            head_blocks.append(one_m_a * agg + a_c * feat0_tile[:, lo:lo + Dh])

        new_tile = jnp.concatenate(head_blocks, axis=-1)               # (Tv, out)
        feat_pp[new_slot, pl.ds(row0, Tv), :] = new_tile

        # ----------------- final hop: residual + ReZero FFN ------------------
        @pl.when(h == hop_num)
        def _finalize():
            ent_tile = ent_ref[...]
            # fold flatten(1) + fc_ent_out into one lane-dense matmul
            upd = jnp.dot(new_tile, w_out_ref[...],
                          preferred_element_type=jnp.float32)          # (Tv, out)
            ent_rst = (jnp.dot(ent_tile, w_res_ent_ref[...],
                               preferred_element_type=jnp.float32)
                       + jnp.float32(rw_ent1) * upd)
            hidden = jnp.maximum(
                jnp.dot(ent_rst, ffn_w1_ref[...],
                        preferred_element_type=jnp.float32) + ffn_b1_ref[...],
                0.0)
            ff = jnp.dot(hidden, ffn_w2_ref[...],
                         preferred_element_type=jnp.float32) + ffn_b2_ref[...]
            ent_out_ref[...] = ent_rst + jnp.float32(rw_ent2) * ff

    # relation residual written once, on the very last grid step (safe under
    # both compiled and interpreted output-buffer semantics).
    @pl.when(jnp.logical_and(h == hop_num, t == pl.num_programs(1) - 1))
    def _rel_out():
        rel_feat = jnp.dot(rel_ref[...], w_rel_ref[...],
                           preferred_element_type=jnp.float32)
        rel_out_ref[...] = (jnp.dot(rel_ref[...], w_res_rel_ref[...],
                                    preferred_element_type=jnp.float32)
                            + jnp.float32(rw_rel) * rel_feat)


def _head_blockdiag(attn, num_heads, att_dim):
    """attn (1, H, Dh) -> block-diagonal (H*Dh, H) so feat @ bd == per-head score."""
    a = attn[0]                                           # (H, Dh)
    eye = jnp.eye(num_heads, dtype=a.dtype)               # (H, H)
    bd = (a[:, :, None] * eye[:, None, :]).reshape(num_heads * att_dim, num_heads)
    return bd


# -------------------------------- wrapper ------------------------------------

def gtransformer_forward(params, ent_embed, rel_embed, e_label, *,
                         num_heads, alpha, hop_num, negative_slope,
                         block_rows=8):
    N, Fe = ent_embed.shape
    R, Fr = rel_embed.shape
    OUT = params['W_ent'].shape[0]
    Dh = OUT // num_heads
    assert N % block_rows == 0, "N must be a multiple of the row tile"
    assert hop_num >= 1
    num_tiles = N // block_rows

    # parameter-only algebra (outside the kernel)
    w_ent_T = params['W_ent'].T
    w_rel_T = params['W_rel'].T
    w_out_T = params['W_out'].T
    w_res_ent_T = params['W_res_ent'].T
    w_res_rel_T = params['W_res_rel'].T
    ah_bd = _head_blockdiag(params['attn_h'], num_heads, Dh)
    at_bd = _head_blockdiag(params['attn_t'], num_heads, Dh)
    ar_bd = _head_blockdiag(params['attn_r'], num_heads, Dh)
    attn_ht = jnp.concatenate([ah_bd, at_bd], axis=1)          # (out, 2H)
    ffn_w1_T = params['ffn_w1'].T
    ffn_w2_T = params['ffn_w2'].T

    kernel = functools.partial(
        _gtransformer_kernel,
        num_heads=num_heads, att_dim=Dh, num_rel=R, block_rows=block_rows,
        alpha=float(alpha), hop_num=int(hop_num),
        negative_slope=float(negative_slope),
        rw_ent1=float(params['resweight_ent_1']),
        rw_ent2=float(params['resweight_ent_2']),
        rw_rel=float(params['resweight_rel']))

    def tile_spec(shape):          # streamed per destination-row tile
        return pl.BlockSpec(shape, lambda h, t: (t, 0))

    def const_spec(shape):         # VMEM-resident across all grid steps
        return pl.BlockSpec(shape, lambda h, t: (0, 0))

    in_arrays = [ent_embed, rel_embed, e_label.astype(jnp.int32),
                 w_ent_T, w_rel_T, w_out_T, w_res_ent_T, w_res_rel_T,
                 attn_ht, ar_bd,
                 ffn_w1_T, params['ffn_b1'], ffn_w2_T, params['ffn_b2']]
    in_specs = ([tile_spec((block_rows, Fe)),
                 const_spec((R, Fr)),
                 tile_spec((block_rows, N))]
                + [const_spec(a.shape) for a in in_arrays[3:]])
    out_specs = (tile_spec((block_rows, OUT)), const_spec((R, OUT)))
    scratch_shapes = [pltpu.VMEM((2, N, OUT), jnp.float32),      # feat ping-pong
                      pltpu.VMEM((N, OUT), jnp.float32),         # feat0
                      pltpu.VMEM((N, 2 * num_heads), jnp.float32),  # [EH|ET]
                      pltpu.VMEM((R, num_heads), jnp.float32)]   # ER

    flops = int(4 * N * Fe * OUT + 4 * R * Fr * OUT
                + 2 * N * OUT * 2 * num_heads + 2 * R * OUT * num_heads
                + hop_num * num_heads * (2 * N * N * Dh + 8 * N * N)
                + hop_num * 2 * R * N * N
                + 2 * N * OUT * OUT + 4 * N * OUT * 4 * OUT)
    transcendentals = int(hop_num * num_heads * N * N)
    bytes_accessed = int(4 * ((hop_num + 1) * (N * N + N * Fe) + R * Fr
                              + 2 * Fe * OUT + 2 * Fr * OUT + 9 * OUT * OUT
                              + 3 * OUT * num_heads + 5 * OUT
                              + N * OUT + R * OUT))

    ent_out, rel_out = pl.pallas_call(
        kernel,
        out_shape=(jax.ShapeDtypeStruct((N, OUT), jnp.float32),
                   jax.ShapeDtypeStruct((R, OUT), jnp.float32)),
        grid_spec=pltpu.PrefetchScalarGridSpec(
            num_scalar_prefetch=0,
            grid=(hop_num + 1, num_tiles),
            in_specs=in_specs,
            out_specs=out_specs,
            scratch_shapes=scratch_shapes),
        compiler_params=pltpu.CompilerParams(
            # both axes sequential: tiles share the feat ping-pong scratch
            # across hops (see TODO about v7x megacore).
            dimension_semantics=("arbitrary", "arbitrary"),
            vmem_limit_bytes=48 * 1024 * 1024),
        cost_estimate=pl.CostEstimate(flops=flops,
                                      transcendentals=transcendentals,
                                      bytes_accessed=bytes_accessed),
    )(*in_arrays)
    return ent_out, rel_out


# --------------------------- parameters -------------------------------------

def init_params(key, in_ent_feats, in_rel_feats, out_feats, num_heads):
    att_dim = out_feats // num_heads
    ks = jax.random.split(key, 10)

    def xavier(k, shape, gain):
        fan_out, fan_in = shape
        std = gain * np.sqrt(2.0 / (fan_in + fan_out))
        return std * jax.random.normal(k, shape, dtype=jnp.float32)

    gain = 1.414
    relu_gain = float(np.sqrt(2.0))
    p = {}
    # nn.Linear weights stored PyTorch-style (out, in)
    p['W_ent'] = xavier(ks[0], (out_feats, in_ent_feats), gain)
    p['W_rel'] = xavier(ks[1], (out_feats, in_rel_feats), gain)
    p['W_out'] = xavier(ks[2], (out_feats, out_feats), gain)
    p['W_res_ent'] = xavier(ks[3], (out_feats, in_ent_feats), gain)
    p['W_res_rel'] = xavier(ks[4], (out_feats, in_rel_feats), gain)
    p['attn_h'] = gain * 0.1 * jax.random.normal(ks[5], (1, num_heads, att_dim), jnp.float32)
    p['attn_t'] = gain * 0.1 * jax.random.normal(ks[6], (1, num_heads, att_dim), jnp.float32)
    p['attn_r'] = gain * 0.1 * jax.random.normal(ks[7], (1, num_heads, att_dim), jnp.float32)
    p['ffn_w1'] = xavier(ks[8], (4 * out_feats, out_feats), relu_gain)
    p['ffn_b1'] = jnp.zeros((1, 4 * out_feats), jnp.float32)
    p['ffn_w2'] = xavier(ks[9], (out_feats, 4 * out_feats), relu_gain)
    p['ffn_b2'] = jnp.zeros((1, out_feats), jnp.float32)
    # ReZero weights: PyTorch inits to 0; use nonzero values so all paths run.
    p['resweight_ent_1'] = 0.5
    p['resweight_ent_2'] = 0.25
    p['resweight_rel'] = 0.5
    return p


# ------------------------------ pure-JAX reference ---------------------------

def reference_forward(params, ent_embed, rel_embed, e_label, *,
                      num_heads, alpha, hop_num, negative_slope):
    N = ent_embed.shape[0]
    R = rel_embed.shape[0]
    out_feats = params['W_ent'].shape[0]
    Dh = out_feats // num_heads
    mask = e_label >= 0                                          # (v, u)
    ent_feat = (ent_embed @ params['W_ent'].T).reshape(N, num_heads, Dh)
    rel_feat = (rel_embed @ params['W_rel'].T).reshape(R, num_heads, Dh)
    eh = jnp.sum(ent_feat * params['attn_h'], -1)                # (N, H)
    et = jnp.sum(ent_feat * params['attn_t'], -1)                # (N, H)
    er = jnp.sum(rel_feat * params['attn_r'], -1)                # (R, H)
    lab = jnp.maximum(e_label, 0)
    logits = eh[None, :, :] + et[:, None, :] + er[lab]           # (v, u, H)
    logits = jnp.where(logits >= 0, logits, negative_slope * logits)
    masked = jnp.where(mask[:, :, None], logits, jnp.float32(-1e9))
    m = jnp.max(masked, axis=1, keepdims=True)
    p = jnp.where(mask[:, :, None], jnp.exp(masked - m), 0.0)
    a = p / jnp.sum(p, axis=1, keepdims=True)                    # (v, u, H)
    feat0 = ent_feat
    feat = feat0
    for _ in range(hop_num):
        feat = jnp.einsum('vuh,uhd->vhd', a, feat)
        feat = (1.0 - alpha) * feat + alpha * feat0
    ent_attn = feat.reshape(N, out_feats)
    ent_rst = (ent_embed @ params['W_res_ent'].T
               + params['resweight_ent_1'] * (ent_attn @ params['W_out'].T))
    rel_rst = (rel_embed @ params['W_res_rel'].T
               + params['resweight_rel'] * rel_feat.reshape(R, out_feats))
    hmid = jnp.maximum(ent_rst @ params['ffn_w1'].T + params['ffn_b1'], 0.0)
    ff = hmid @ params['ffn_w2'].T + params['ffn_b2']
    ent_rst = ent_rst + params['resweight_ent_2'] * ff
    return ent_rst, rel_rst


# ------------------------------------ main -----------------------------------

if __name__ == "__main__":
    N, R = 16, 8
    in_ent_feats, in_rel_feats, out_feats, num_heads = 48, 40, 32, 4
    alpha, hop_num, negative_slope = 0.15, 3, 0.2

    key = jax.random.PRNGKey(0)
    k_p, k_e, k_r, k_adj, k_lab = jax.random.split(key, 5)
    params = init_params(k_p, in_ent_feats, in_rel_feats, out_feats, num_heads)

    ent_embed = jax.random.normal(k_e, (N, in_ent_feats), jnp.float32)
    rel_embed = jax.random.normal(k_r, (R, in_rel_feats), jnp.float32)

    # random graph; self-loops guarantee every node has >= 1 incoming edge
    adj = (jax.random.uniform(k_adj, (N, N)) < 0.3).astype(jnp.float32)
    adj = jnp.maximum(adj, jnp.eye(N, dtype=jnp.float32))
    labels = jax.random.randint(k_lab, (N, N), 0, R)
    e_label = jnp.where(adj > 0, labels, -1).astype(jnp.int32)   # -1 == no edge

    ent_out, rel_out = gtransformer_forward(
        params, ent_embed, rel_embed, e_label,
        num_heads=num_heads, alpha=alpha, hop_num=hop_num,
        negative_slope=negative_slope, block_rows=8)
    ent_out, rel_out = jax.block_until_ready((ent_out, rel_out))

    ent_ref, rel_ref = reference_forward(
        params, ent_embed, rel_embed, e_label,
        num_heads=num_heads, alpha=alpha, hop_num=hop_num,
        negative_slope=negative_slope)

    np.testing.assert_allclose(np.asarray(ent_out), np.asarray(ent_ref),
                               rtol=5e-3, atol=5e-3)
    np.testing.assert_allclose(np.asarray(rel_out), np.asarray(rel_ref),
                               rtol=5e-3, atol=5e-3)
    print("KERNEL_OK")
</pallas_src>

<mosaic_0001>
module attributes {stable_mosaic.version = 11 : i64} {
  func.func @_gtransformer_kernel(%arg0: i32, %arg1: i32, %arg2: memref<8x48xf32, #tpu.memory_space<vmem>>, %arg3: memref<8x40xf32, #tpu.memory_space<vmem>>, %arg4: memref<8x16xi32, #tpu.memory_space<vmem>>, %arg5: memref<48x32xf32, #tpu.memory_space<vmem>>, %arg6: memref<40x32xf32, #tpu.memory_space<vmem>>, %arg7: memref<32x32xf32, #tpu.memory_space<vmem>>, %arg8: memref<48x32xf32, #tpu.memory_space<vmem>>, %arg9: memref<40x32xf32, #tpu.memory_space<vmem>>, %arg10: memref<32x8xf32, #tpu.memory_space<vmem>>, %arg11: memref<32x4xf32, #tpu.memory_space<vmem>>, %arg12: memref<32x128xf32, #tpu.memory_space<vmem>>, %arg13: memref<1x128xf32, #tpu.memory_space<vmem>>, %arg14: memref<128x32xf32, #tpu.memory_space<vmem>>, %arg15: memref<1x32xf32, #tpu.memory_space<vmem>>, %arg16: memref<8x32xf32, #tpu.memory_space<vmem>>, %arg17: memref<8x32xf32, #tpu.memory_space<vmem>>, %arg18: memref<2x16x32xf32, #tpu.memory_space<vmem>>, %arg19: memref<16x32xf32, #tpu.memory_space<vmem>>, %arg20: memref<16x8xf32, #tpu.memory_space<vmem>>, %arg21: memref<8x4xf32, #tpu.memory_space<vmem>>) attributes {dimension_semantics = [#tpu.dimension_semantics<arbitrary>, #tpu.dimension_semantics<arbitrary>], iteration_bounds = array<i64: 4, 2>, scalar_prefetch = 0 : i64, scratch_operands = 4 : i64, tpu.core_type = #tpu.core_type<tc>, window_params = [{transform_indices = @transform_0, window_bounds = array<i64: 8, 48>}, {pipeline_mode = #tpu.pipeline_mode<synchronous>, transform_indices = @transform_1, window_bounds = array<i64: 8, 40>}, {transform_indices = @transform_2, window_bounds = array<i64: 8, 16>}, {pipeline_mode = #tpu.pipeline_mode<synchronous>, transform_indices = @transform_3, window_bounds = array<i64: 48, 32>}, {pipeline_mode = #tpu.pipeline_mode<synchronous>, transform_indices = @transform_4, window_bounds = array<i64: 40, 32>}, {pipeline_mode = #tpu.pipeline_mode<synchronous>, transform_indices = @transform_5, window_bounds = array<i64: 32, 32>}, {pipeline_mode = #tpu.pipeline_mode<synchronous>, transform_indices = @transform_6, window_bounds = array<i64: 48, 32>}, {pipeline_mode = #tpu.pipeline_mode<synchronous>, transform_indices = @transform_7, window_bounds = array<i64: 40, 32>}, {pipeline_mode = #tpu.pipeline_mode<synchronous>, transform_indices = @transform_8, window_bounds = array<i64: 32, 8>}, {pipeline_mode = #tpu.pipeline_mode<synchronous>, transform_indices = @transform_9, window_bounds = array<i64: 32, 4>}, {pipeline_mode = #tpu.pipeline_mode<synchronous>, transform_indices = @transform_10, window_bounds = array<i64: 32, 128>}, {pipeline_mode = #tpu.pipeline_mode<synchronous>, transform_indices = @transform_11, window_bounds = array<i64: 1, 128>}, {pipeline_mode = #tpu.pipeline_mode<synchronous>, transform_indices = @transform_12, window_bounds = array<i64: 128, 32>}, {pipeline_mode = #tpu.pipeline_mode<synchronous>, transform_indices = @transform_13, window_bounds = array<i64: 1, 32>}, {transform_indices = @transform_14, window_bounds = array<i64: 8, 32>}, {pipeline_mode = #tpu.pipeline_mode<synchronous>, transform_indices = @transform_15, window_bounds = array<i64: 8, 32>}]} {
    %c8_i32 = arith.constant 8 : i32
    %0 = arith.muli %arg1, %c8_i32 : i32
    %1 = tpu.assume_multiple %0, 8 : i32
    %c0_i32 = arith.constant 0 : i32
    %2 = arith.cmpi eq, %arg0, %c0_i32 : i32
    %3 = arith.extui %2 : i1 to i32
    %c0_i32_0 = arith.constant 0 : i32
    %4 = arith.cmpi ne, %3, %c0_i32_0 : i32
    scf.if %4 {
      %c0 = arith.constant 0 : index
      %c0_4 = arith.constant 0 : index
      %13 = vector.load %arg2[%c0, %c0_4] : memref<8x48xf32, #tpu.memory_space<vmem>>, vector<8x48xf32>
      %c0_5 = arith.constant 0 : index
      %c0_6 = arith.constant 0 : index
      %14 = vector.load %arg5[%c0_5, %c0_6] : memref<48x32xf32, #tpu.memory_space<vmem>>, vector<48x32xf32>
      %cst = arith.constant dense<0.000000e+00> : vector<8x32xf32>
      %15 = tpu.matmul %13, %14, %cst {dimension_numbers = #tpu.dot_dimension_numbers<[1], [0], [0], [1], [0, 0, 1, 1], [], []>} : vector<8x48xf32>, vector<48x32xf32>, vector<8x32xf32> -> vector<8x32xf32>
      %16 = arith.index_cast %1 : i32 to index
      %c0_7 = arith.constant 0 : index
      %17 = vector.load %arg19[%16, %c0_7] : memref<16x32xf32, #tpu.memory_space<vmem>>, vector<8x32xf32>
      tpu.vector_store %arg19[%16, %c0_7], %15 {strides = array<i32>} : memref<16x32xf32, #tpu.memory_space<vmem>>, vector<8x32xf32>,
      %c0_8 = arith.constant 0 : index
      %18 = arith.index_cast %1 : i32 to index
      %c0_9 = arith.constant 0 : index
      %19 = vector.load %arg18[%c0_8, %18, %c0_9] : memref<2x16x32xf32, #tpu.memory_space<vmem>>, vector<1x8x32xf32>
      %20 = vector.shape_cast %19 : vector<1x8x32xf32> to vector<8x32xf32>
      %21 = vector.shape_cast %15 : vector<8x32xf32> to vector<1x8x32xf32>
      tpu.vector_store %arg18[%c0_8, %18, %c0_9], %21 {strides = array<i32>} : memref<2x16x32xf32, #tpu.memory_space<vmem>>, vector<1x8x32xf32>,
      %c0_10 = arith.constant 0 : index
      %c0_11 = arith.constant 0 : index
      %22 = vector.load %arg10[%c0_10, %c0_11] : memref<32x8xf32, #tpu.memory_space<vmem>>, vector<32x8xf32>
      %cst_12 = arith.constant dense<0.000000e+00> : vector<8x8xf32>
      %23 = tpu.matmul %15, %22, %cst_12 {dimension_numbers = #tpu.dot_dimension_numbers<[1], [0], [0], [1], [0, 0, 1, 1], [], []>} : vector<8x32xf32>, vector<32x8xf32>, vector<8x8xf32> -> vector<8x8xf32>
      %24 = arith.index_cast %1 : i32 to index
      %c0_13 = arith.constant 0 : index
      %25 = vector.load %arg20[%24, %c0_13] : memref<16x8xf32, #tpu.memory_space<vmem>>, vector<8x8xf32>
      tpu.vector_store %arg20[%24, %c0_13], %23 {strides = array<i32>} : memref<16x8xf32, #tpu.memory_space<vmem>>, vector<8x8xf32>,
      %c0_i32_14 = arith.constant 0 : i32
      %26 = arith.cmpi eq, %arg1, %c0_i32_14 : i32
      %27 = arith.extui %26 : i1 to i32
      %c0_i32_15 = arith.constant 0 : i32
      %28 = arith.cmpi ne, %27, %c0_i32_15 : i32
      scf.if %28 {
        %c0_16 = arith.constant 0 : index
        %c0_17 = arith.constant 0 : index
        %29 = vector.load %arg3[%c0_16, %c0_17] : memref<8x40xf32, #tpu.memory_space<vmem>>, vector<8x40xf32>
        %c0_18 = arith.constant 0 : index
        %c0_19 = arith.constant 0 : index
        %30 = vector.load %arg6[%c0_18, %c0_19] : memref<40x32xf32, #tpu.memory_space<vmem>>, vector<40x32xf32>
        %cst_20 = arith.constant dense<0.000000e+00> : vector<8x32xf32>
        %31 = tpu.matmul %29, %30, %cst_20 {dimension_numbers = #tpu.dot_dimension_numbers<[1], [0], [0], [1], [0, 0, 1, 1], [], []>} : vector<8x40xf32>, vector<40x32xf32>, vector<8x32xf32> -> vector<8x32xf32>
        %c0_21 = arith.constant 0 : index
        %c0_22 = arith.constant 0 : index
        %32 = vector.load %arg11[%c0_21, %c0_22] : memref<32x4xf32, #tpu.memory_space<vmem>>, vector<32x4xf32>
        %cst_23 = arith.constant dense<0.000000e+00> : vector<8x4xf32>
        %33 = tpu.matmul %31, %32, %cst_23 {dimension_numbers = #tpu.dot_dimension_numbers<[1], [0], [0], [1], [0, 0, 1, 1], [], []>} : vector<8x32xf32>, vector<32x4xf32>, vector<8x4xf32> -> vector<8x4xf32>
        %c0_24 = arith.constant 0 : index
        %c0_25 = arith.constant 0 : index
        %34 = vector.load %arg21[%c0_24, %c0_25] : memref<8x4xf32, #tpu.memory_space<vmem>>, vector<8x4xf32>
        tpu.vector_store %arg21[%c0_24, %c0_25], %33 {strides = array<i32>} : memref<8x4xf32, #tpu.memory_space<vmem>>, vector<8x4xf32>,
      } else {
      }
    } else {
    }
    %c0_i32_1 = arith.constant 0 : i32
    %5 = arith.cmpi sgt, %arg0, %c0_i32_1 : i32
    %6 = arith.extui %5 : i1 to i32
    %c0_i32_2 = arith.constant 0 : i32
    %7 = arith.cmpi ne, %6, %c0_i32_2 : i32
    scf.if %7 {
      %c1_i32_4 = arith.constant 1 : i32
      %13 = arith.addi %arg0, %c1_i32_4 : i32
      %c1_i32_5 = arith.constant 1 : i32
      %14 = arith.andi %13, %c1_i32_5 : i32
      %c1_i32_6 = arith.constant 1 : i32
      %15 = arith.andi %arg0, %c1_i32_6 : i32
      %c0 = arith.constant 0 : index
      %c0_7 = arith.constant 0 : index
      %16 = vector.load %arg4[%c0, %c0_7] : memref<8x16xi32, #tpu.memory_space<vmem>>, vector<8x16xi32>
      %c0_i32_8 = arith.constant 0 : i32
      %17 = vector.broadcast %c0_i32_8 : i32 to vector<8x16xi32>
      %18 = arith.cmpi sge, %16, %17 : vector<8x16xi32>
      %19 = arith.index_cast %14 : i32 to index
      %c0_9 = arith.constant 0 : index
      %c0_10 = arith.constant 0 : index
      %20 = vector.load %arg18[%19, %c0_9, %c0_10] : memref<2x16x32xf32, #tpu.memory_space<vmem>>, vector<1x16x32xf32>
      %21 = vector.shape_cast %20 : vector<1x16x32xf32> to vector<16x32xf32>
      %22 = arith.index_cast %1 : i32 to index
      %c0_11 = arith.constant 0 : index
      %23 = vector.load %arg19[%22, %c0_11] : memref<16x32xf32, #tpu.memory_space<vmem>>, vector<8x32xf32>
      %c0_12 = arith.constant 0 : index
      %c0_13 = arith.constant 0 : index
      %24 = vector.load %arg20[%c0_12, %c0_13] : memref<16x8xf32, #tpu.memory_space<vmem>>, vector<16x8xf32>
      %25 = arith.index_cast %1 : i32 to index
      %c0_14 = arith.constant 0 : index
      %26 = vector.load %arg20[%25, %c0_14] : memref<16x8xf32, #tpu.memory_space<vmem>>, vector<8x8xf32>
      %27 = vector.extract_strided_slice %24 {offsets = [0, 0], sizes = [16, 4], strides = [1, 1]} : vector<16x8xf32> to vector<16x4xf32>
      %28 = tpu.transpose %27, [1, 0] : vector<16x4xf32> -> vector<4x16xf32>
      %29 = vector.extract_strided_slice %26 {offsets = [0, 4], sizes = [8, 4], strides = [1, 1]} : vector<8x8xf32> to vector<8x4xf32>
      %c0_15 = arith.constant 0 : index
      %c0_16 = arith.constant 0 : index
      %30 = vector.load %arg21[%c0_15, %c0_16] : memref<8x4xf32, #tpu.memory_space<vmem>>, vector<8x4xf32>
      %c0_i32_17 = arith.constant 0 : i32
      %31 = vector.broadcast %c0_i32_17 : i32 to vector<8x16xi32>
      %32 = arith.cmpi eq, %16, %31 : vector<8x16xi32>
      %33 = arith.extui %32 : vector<8x16xi1> to vector<8x16xi32>
      %34 = arith.sitofp %33 : vector<8x16xi32> to vector<8x16xf32>
      %c1_i32_18 = arith.constant 1 : i32
      %35 = vector.broadcast %c1_i32_18 : i32 to vector<8x16xi32>
      %36 = arith.cmpi eq, %16, %35 : vector<8x16xi32>
      %37 = arith.extui %36 : vector<8x16xi1> to vector<8x16xi32>
      %38 = arith.sitofp %37 : vector<8x16xi32> to vector<8x16xf32>
      %c2_i32 = arith.constant 2 : i32
      %39 = vector.broadcast %c2_i32 : i32 to vector<8x16xi32>
      %40 = arith.cmpi eq, %16, %39 : vector<8x16xi32>
      %41 = arith.extui %40 : vector<8x16xi1> to vector<8x16xi32>
      %42 = arith.sitofp %41 : vector<8x16xi32> to vector<8x16xf32>
      %c3_i32_19 = arith.constant 3 : i32
      %43 = vector.broadcast %c3_i32_19 : i32 to vector<8x16xi32>
      %44 = arith.cmpi eq, %16, %43 : vector<8x16xi32>
      %45 = arith.extui %44 : vector<8x16xi1> to vector<8x16xi32>
      %46 = arith.sitofp %45 : vector<8x16xi32> to vector<8x16xf32>
      %c4_i32 = arith.constant 4 : i32
      %47 = vector.broadcast %c4_i32 : i32 to vector<8x16xi32>
      %48 = arith.cmpi eq, %16, %47 : vector<8x16xi32>
      %49 = arith.extui %48 : vector<8x16xi1> to vector<8x16xi32>
      %50 = arith.sitofp %49 : vector<8x16xi32> to vector<8x16xf32>
      %c5_i32 = arith.constant 5 : i32
      %51 = vector.broadcast %c5_i32 : i32 to vector<8x16xi32>
      %52 = arith.cmpi eq, %16, %51 : vector<8x16xi32>
      %53 = arith.extui %52 : vector<8x16xi1> to vector<8x16xi32>
      %54 = arith.sitofp %53 : vector<8x16xi32> to vector<8x16xf32>
      %c6_i32 = arith.constant 6 : i32
      %55 = vector.broadcast %c6_i32 : i32 to vector<8x16xi32>
      %56 = arith.cmpi eq, %16, %55 : vector<8x16xi32>
      %57 = arith.extui %56 : vector<8x16xi1> to vector<8x16xi32>
      %58 = arith.sitofp %57 : vector<8x16xi32> to vector<8x16xf32>
      %c7_i32 = arith.constant 7 : i32
      %59 = vector.broadcast %c7_i32 : i32 to vector<8x16xi32>
      %60 = arith.cmpi eq, %16, %59 : vector<8x16xi32>
      %61 = arith.extui %60 : vector<8x16xi1> to vector<8x16xi32>
      %62 = arith.sitofp %61 : vector<8x16xi32> to vector<8x16xf32>
      %63 = vector.extract_strided_slice %30 {offsets = [0, 0], sizes = [1, 1], strides = [1, 1]} : vector<8x4xf32> to vector<1x1xf32>
      %64 = vector.broadcast %63 : vector<1x1xf32> to vector<8x16xf32>
      %65 = arith.mulf %34, %64 : vector<8x16xf32>
      %66 = vector.extract_strided_slice %30 {offsets = [1, 0], sizes = [1, 1], strides = [1, 1]} : vector<8x4xf32> to vector<1x1xf32>
      %67 = vector.broadcast %66 : vector<1x1xf32> to vector<8x16xf32>
      %68 = arith.mulf %38, %67 : vector<8x16xf32>
      %69 = arith.addf %65, %68 : vector<8x16xf32>
      %70 = vector.extract_strided_slice %30 {offsets = [2, 0], sizes = [1, 1], strides = [1, 1]} : vector<8x4xf32> to vector<1x1xf32>
      %71 = vector.broadcast %70 : vector<1x1xf32> to vector<8x16xf32>
      %72 = arith.mulf %42, %71 : vector<8x16xf32>
      %73 = arith.addf %69, %72 : vector<8x16xf32>
      %74 = vector.extract_strided_slice %30 {offsets = [3, 0], sizes = [1, 1], strides = [1, 1]} : vector<8x4xf32> to vector<1x1xf32>
      %75 = vector.broadcast %74 : vector<1x1xf32> to vector<8x16xf32>
      %76 = arith.mulf %46, %75 : vector<8x16xf32>
      %77 = arith.addf %73, %76 : vector<8x16xf32>
      %78 = vector.extract_strided_slice %30 {offsets = [4, 0], sizes = [1, 1], strides = [1, 1]} : vector<8x4xf32> to vector<1x1xf32>
      %79 = vector.broadcast %78 : vector<1x1xf32> to vector<8x16xf32>
      %80 = arith.mulf %50, %79 : vector<8x16xf32>
      %81 = arith.addf %77, %80 : vector<8x16xf32>
      %82 = vector.extract_strided_slice %30 {offsets = [5, 0], sizes = [1, 1], strides = [1, 1]} : vector<8x4xf32> to vector<1x1xf32>
      %83 = vector.broadcast %82 : vector<1x1xf32> to vector<8x16xf32>
      %84 = arith.mulf %54, %83 : vector<8x16xf32>
      %85 = arith.addf %81, %84 : vector<8x16xf32>
      %86 = vector.extract_strided_slice %30 {offsets = [6, 0], sizes = [1, 1], strides = [1, 1]} : vector<8x4xf32> to vector<1x1xf32>
      %87 = vector.broadcast %86 : vector<1x1xf32> to vector<8x16xf32>
      %88 = arith.mulf %58, %87 : vector<8x16xf32>
      %89 = arith.addf %85, %88 : vector<8x16xf32>
      %90 = vector.extract_strided_slice %30 {offsets = [7, 0], sizes = [1, 1], strides = [1, 1]} : vector<8x4xf32> to vector<1x1xf32>
      %91 = vector.broadcast %90 : vector<1x1xf32> to vector<8x16xf32>
      %92 = arith.mulf %62, %91 : vector<8x16xf32>
      %93 = arith.addf %89, %92 : vector<8x16xf32>
      %94 = vector.extract_strided_slice %28 {offsets = [0, 0], sizes = [1, 16], strides = [1, 1]} : vector<4x16xf32> to vector<1x16xf32>
      %95 = vector.extract_strided_slice %29 {offsets = [0, 0], sizes = [8, 1], strides = [1, 1]} : vector<8x4xf32> to vector<8x1xf32>
      %96 = vector.broadcast %94 : vector<1x16xf32> to vector<8x16xf32>
      %97 = vector.broadcast %95 : vector<8x1xf32> to vector<8x16xf32>
      %98 = arith.addf %96, %97 : vector<8x16xf32>
      %99 = arith.addf %98, %93 : vector<8x16xf32>
      %cst = arith.constant 0.000000e+00 : f32
      %100 = vector.broadcast %cst : f32 to vector<8x16xf32>
      %101 = arith.cmpf oge, %99, %100 : vector<8x16xf32>
      %cst_20 = arith.constant 2.000000e-01 : f32
      %102 = vector.broadcast %cst_20 : f32 to vector<8x16xf32>
      %103 = arith.mulf %102, %99 : vector<8x16xf32>
      %104 = arith.select %101, %99, %103 : vector<8x16xi1>, vector<8x16xf32>
      %cst_21 = arith.constant -1.000000e+09 : f32
      %105 = vector.broadcast %cst_21 : f32 to vector<8x16xf32>
      %106 = arith.select %18, %104, %105 : vector<8x16xi1>, vector<8x16xf32>
      %cst_22 = arith.constant dense<0xFF800000> : vector<8xf32>
      %107 = vector.multi_reduction <maximumf>, %106, %cst_22 [1] : vector<8x16xf32> to vector<8xf32>
      %108 = vector.shape_cast %107 : vector<8xf32> to vector<8x1xf32>
      %109 = vector.broadcast %108 : vector<8x1xf32> to vector<8x16xf32>
      %110 = arith.subf %106, %109 : vector<8x16xf32>
      %111 = math.exp %110 : vector<8x16xf32>
      %cst_23 = arith.constant 0.000000e+00 : f32
      %112 = vector.broadcast %cst_23 : f32 to vector<8x16xf32>
      %113 = arith.select %18, %111, %112 : vector<8x16xi1>, vector<8x16xf32>
      %cst_24 = arith.constant dense<0.000000e+00> : vector<8xf32>
      %114 = vector.multi_reduction <add>, %113, %cst_24 [1] : vector<8x16xf32> to vector<8xf32>
      %115 = vector.shape_cast %114 : vector<8xf32> to vector<8x1xf32>
      %cst_25 = arith.constant 0.000000e+00 : f32
      %116 = vector.broadcast %cst_25 : f32 to vector<8x1xf32>
      %117 = arith.cmpf ogt, %115, %116 : vector<8x1xf32>
      %cst_26 = arith.constant 1.000000e+00 : f32
      %118 = vector.broadcast %cst_26 : f32 to vector<8x1xf32>
      %119 = arith.select %117, %115, %118 : vector<8x1xi1>, vector<8x1xf32>
      %120 = vector.broadcast %119 : vector<8x1xf32> to vector<8x16xf32>
      %121 = arith.divf %113, %120 : vector<8x16xf32>
      %122 = vector.extract_strided_slice %21 {offsets = [0, 0], sizes = [16, 8], strides = [1, 1]} : vector<16x32xf32> to vector<16x8xf32>
      %cst_27 = arith.constant dense<0.000000e+00> : vector<8x8xf32>
      %123 = tpu.matmul %121, %122, %cst_27 {dimension_numbers = #tpu.dot_dimension_numbers<[1], [0], [0], [1], [0, 0, 1, 1], [], []>} : vector<8x16xf32>, vector<16x8xf32>, vector<8x8xf32> -> vector<8x8xf32>
      %cst_28 = arith.constant 8.500000e-01 : f32
      %124 = vector.broadcast %cst_28 : f32 to vector<8x8xf32>
      %125 = arith.mulf %124, %123 : vector<8x8xf32>
      %126 = vector.extract_strided_slice %23 {offsets = [0, 0], sizes = [8, 8], strides = [1, 1]} : vector<8x32xf32> to vector<8x8xf32>
      %cst_29 = arith.constant 1.500000e-01 : f32
      %127 = vector.broadcast %cst_29 : f32 to vector<8x8xf32>
      %128 = arith.mulf %127, %126 : vector<8x8xf32>
      %129 = arith.addf %125, %128 : vector<8x8xf32>
      %130 = vector.extract_strided_slice %30 {offsets = [0, 1], sizes = [1, 1], strides = [1, 1]} : vector<8x4xf32> to vector<1x1xf32>
      %131 = vector.broadcast %130 : vector<1x1xf32> to vector<8x16xf32>
      %132 = arith.mulf %34, %131 : vector<8x16xf32>
      %133 = vector.extract_strided_slice %30 {offsets = [1, 1], sizes = [1, 1], strides = [1, 1]} : vector<8x4xf32> to vector<1x1xf32>
      %134 = vector.broadcast %133 : vector<1x1xf32> to vector<8x16xf32>
      %135 = arith.mulf %38, %134 : vector<8x16xf32>
      %136 = arith.addf %132, %135 : vector<8x16xf32>
      %137 = vector.extract_strided_slice %30 {offsets = [2, 1], sizes = [1, 1], strides = [1, 1]} : vector<8x4xf32> to vector<1x1xf32>
      %138 = vector.broadcast %137 : vector<1x1xf32> to vector<8x16xf32>
      %139 = arith.mulf %42, %138 : vector<8x16xf32>
      %140 = arith.addf %136, %139 : vector<8x16xf32>
      %141 = vector.extract_strided_slice %30 {offsets = [3, 1], sizes = [1, 1], strides = [1, 1]} : vector<8x4xf32> to vector<1x1xf32>
      %142 = vector.broadcast %141 : vector<1x1xf32> to vector<8x16xf32>
      %143 = arith.mulf %46, %142 : vector<8x16xf32>
      %144 = arith.addf %140, %143 : vector<8x16xf32>
      %145 = vector.extract_strided_slice %30 {offsets = [4, 1], sizes = [1, 1], strides = [1, 1]} : vector<8x4xf32> to vector<1x1xf32>
      %146 = vector.broadcast %145 : vector<1x1xf32> to vector<8x16xf32>
      %147 = arith.mulf %50, %146 : vector<8x16xf32>
      %148 = arith.addf %144, %147 : vector<8x16xf32>
      %149 = vector.extract_strided_slice %30 {offsets = [5, 1], sizes = [1, 1], strides = [1, 1]} : vector<8x4xf32> to vector<1x1xf32>
      %150 = vector.broadcast %149 : vector<1x1xf32> to vector<8x16xf32>
      %151 = arith.mulf %54, %150 : vector<8x16xf32>
      %152 = arith.addf %148, %151 : vector<8x16xf32>
      %153 = vector.extract_strided_slice %30 {offsets = [6, 1], sizes = [1, 1], strides = [1, 1]} : vector<8x4xf32> to vector<1x1xf32>
      %154 = vector.broadcast %153 : vector<1x1xf32> to vector<8x16xf32>
      %155 = arith.mulf %58, %154 : vector<8x16xf32>
      %156 = arith.addf %152, %155 : vector<8x16xf32>
      %157 = vector.extract_strided_slice %30 {offsets = [7, 1], sizes = [1, 1], strides = [1, 1]} : vector<8x4xf32> to vector<1x1xf32>
      %158 = vector.broadcast %157 : vector<1x1xf32> to vector<8x16xf32>
      %159 = arith.mulf %62, %158 : vector<8x16xf32>
      %160 = arith.addf %156, %159 : vector<8x16xf32>
      %161 = vector.extract_strided_slice %28 {offsets = [1, 0], sizes = [1, 16], strides = [1, 1]} : vector<4x16xf32> to vector<1x16xf32>
      %162 = vector.extract_strided_slice %29 {offsets = [0, 1], sizes = [8, 1], strides = [1, 1]} : vector<8x4xf32> to vector<8x1xf32>
      %163 = vector.broadcast %161 : vector<1x16xf32> to vector<8x16xf32>
      %164 = vector.broadcast %162 : vector<8x1xf32> to vector<8x16xf32>
      %165 = arith.addf %163, %164 : vector<8x16xf32>
      %166 = arith.addf %165, %160 : vector<8x16xf32>
      %cst_30 = arith.constant 0.000000e+00 : f32
      %167 = vector.broadcast %cst_30 : f32 to vector<8x16xf32>
      %168 = arith.cmpf oge, %166, %167 : vector<8x16xf32>
      %cst_31 = arith.constant 2.000000e-01 : f32
      %169 = vector.broadcast %cst_31 : f32 to vector<8x16xf32>
      %170 = arith.mulf %169, %166 : vector<8x16xf32>
      %171 = arith.select %168, %166, %170 : vector<8x16xi1>, vector<8x16xf32>
      %cst_32 = arith.constant -1.000000e+09 : f32
      %172 = vector.broadcast %cst_32 : f32 to vector<8x16xf32>
      %173 = arith.select %18, %171, %172 : vector<8x16xi1>, vector<8x16xf32>
      %cst_33 = arith.constant dense<0xFF800000> : vector<8xf32>
      %174 = vector.multi_reduction <maximumf>, %173, %cst_33 [1] : vector<8x16xf32> to vector<8xf32>
      %175 = vector.shape_cast %174 : vector<8xf32> to vector<8x1xf32>
      %176 = vector.broadcast %175 : vector<8x1xf32> to vector<8x16xf32>
      %177 = arith.subf %173, %176 : vector<8x16xf32>
      %178 = math.exp %177 : vector<8x16xf32>
      %cst_34 = arith.constant 0.000000e+00 : f32
      %179 = vector.broadcast %cst_34 : f32 to vector<8x16xf32>
      %180 = arith.select %18, %178, %179 : vector<8x16xi1>, vector<8x16xf32>
      %cst_35 = arith.constant dense<0.000000e+00> : vector<8xf32>
      %181 = vector.multi_reduction <add>, %180, %cst_35 [1] : vector<8x16xf32> to vector<8xf32>
      %182 = vector.shape_cast %181 : vector<8xf32> to vector<8x1xf32>
      %cst_36 = arith.constant 0.000000e+00 : f32
      %183 = vector.broadcast %cst_36 : f32 to vector<8x1xf32>
      %184 = arith.cmpf ogt, %182, %183 : vector<8x1xf32>
      %cst_37 = arith.constant 1.000000e+00 : f32
      %185 = vector.broadcast %cst_37 : f32 to vector<8x1xf32>
      %186 = arith.select %184, %182, %185 : vector<8x1xi1>, vector<8x1xf32>
      %187 = vector.broadcast %186 : vector<8x1xf32> to vector<8x16xf32>
      %188 = arith.divf %180, %187 : vector<8x16xf32>
      %189 = vector.extract_strided_slice %21 {offsets = [0, 8], sizes = [16, 8], strides = [1, 1]} : vector<16x32xf32> to vector<16x8xf32>
      %cst_38 = arith.constant dense<0.000000e+00> : vector<8x8xf32>
      %190 = tpu.matmul %188, %189, %cst_38 {dimension_numbers = #tpu.dot_dimension_numbers<[1], [0], [0], [1], [0, 0, 1, 1], [], []>} : vector<8x16xf32>, vector<16x8xf32>, vector<8x8xf32> -> vector<8x8xf32>
      %cst_39 = arith.constant 8.500000e-01 : f32
      %191 = vector.broadcast %cst_39 : f32 to vector<8x8xf32>
      %192 = arith.mulf %191, %190 : vector<8x8xf32>
      %193 = vector.extract_strided_slice %23 {offsets = [0, 8], sizes = [8, 8], strides = [1, 1]} : vector<8x32xf32> to vector<8x8xf32>
      %cst_40 = arith.constant 1.500000e-01 : f32
      %194 = vector.broadcast %cst_40 : f32 to vector<8x8xf32>
      %195 = arith.mulf %194, %193 : vector<8x8xf32>
      %196 = arith.addf %192, %195 : vector<8x8xf32>
      %197 = vector.extract_strided_slice %30 {offsets = [0, 2], sizes = [1, 1], strides = [1, 1]} : vector<8x4xf32> to vector<1x1xf32>
      %198 = vector.broadcast %197 : vector<1x1xf32> to vector<8x16xf32>
      %199 = arith.mulf %34, %198 : vector<8x16xf32>
      %200 = vector.extract_strided_slice %30 {offsets = [1, 2], sizes = [1, 1], strides = [1, 1]} : vector<8x4xf32> to vector<1x1xf32>
      %201 = vector.broadcast %200 : vector<1x1xf32> to vector<8x16xf32>
      %202 = arith.mulf %38, %201 : vector<8x16xf32>
      %203 = arith.addf %199, %202 : vector<8x16xf32>
      %204 = vector.extract_strided_slice %30 {offsets = [2, 2], sizes = [1, 1], strides = [1, 1]} : vector<8x4xf32> to vector<1x1xf32>
      %205 = vector.broadcast %204 : vector<1x1xf32> to vector<8x16xf32>
      %206 = arith.mulf %42, %205 : vector<8x16xf32>
      %207 = arith.addf %203, %206 : vector<8x16xf32>
      %208 = vector.extract_strided_slice %30 {offsets = [3, 2], sizes = [1, 1], strides = [1, 1]} : vector<8x4xf32> to vector<1x1xf32>
      %209 = vector.broadcast %208 : vector<1x1xf32> to vector<8x16xf32>
      %210 = arith.mulf %46, %209 : vector<8x16xf32>
      %211 = arith.addf %207, %210 : vector<8x16xf32>
      %212 = vector.extract_strided_slice %30 {offsets = [4, 2], sizes = [1, 1], strides = [1, 1]} : vector<8x4xf32> to vector<1x1xf32>
      %213 = vector.broadcast %212 : vector<1x1xf32> to vector<8x16xf32>
      %214 = arith.mulf %50, %213 : vector<8x16xf32>
      %215 = arith.addf %211, %214 : vector<8x16xf32>
      %216 = vector.extract_strided_slice %30 {offsets = [5, 2], sizes = [1, 1], strides = [1, 1]} : vector<8x4xf32> to vector<1x1xf32>
      %217 = vector.broadcast %216 : vector<1x1xf32> to vector<8x16xf32>
      %218 = arith.mulf %54, %217 : vector<8x16xf32>
      %219 = arith.addf %215, %218 : vector<8x16xf32>
      %220 = vector.extract_strided_slice %30 {offsets = [6, 2], sizes = [1, 1], strides = [1, 1]} : vector<8x4xf32> to vector<1x1xf32>
      %221 = vector.broadcast %220 : vector<1x1xf32> to vector<8x16xf32>
      %222 = arith.mulf %58, %221 : vector<8x16xf32>
      %223 = arith.addf %219, %222 : vector<8x16xf32>
      %224 = vector.extract_strided_slice %30 {offsets = [7, 2], sizes = [1, 1], strides = [1, 1]} : vector<8x4xf32> to vector<1x1xf32>
      %225 = vector.broadcast %224 : vector<1x1xf32> to vector<8x16xf32>
      %226 = arith.mulf %62, %225 : vector<8x16xf32>
      %227 = arith.addf %223, %226 : vector<8x16xf32>
      %228 = vector.extract_strided_slice %28 {offsets = [2, 0], sizes = [1, 16], strides = [1, 1]} : vector<4x16xf32> to vector<1x16xf32>
      %229 = vector.extract_strided_slice %29 {offsets = [0, 2], sizes = [8, 1], strides = [1, 1]} : vector<8x4xf32> to vector<8x1xf32>
      %230 = vector.broadcast %228 : vector<1x16xf32> to vector<8x16xf32>
      %231 = vector.broadcast %229 : vector<8x1xf32> to vector<8x16xf32>
      %232 = arith.addf %230, %231 : vector<8x16xf32>
      %233 = arith.addf %232, %227 : vector<8x16xf32>
      %cst_41 = arith.constant 0.000000e+00 : f32
      %234 = vector.broadcast %cst_41 : f32 to vector<8x16xf32>
      %235 = arith.cmpf oge, %233, %234 : vector<8x16xf32>
      %cst_42 = arith.constant 2.000000e-01 : f32
      %236 = vector.broadcast %cst_42 : f32 to vector<8x16xf32>
      %237 = arith.mulf %236, %233 : vector<8x16xf32>
      %238 = arith.select %235, %233, %237 : vector<8x16xi1>, vector<8x16xf32>
      %cst_43 = arith.constant -1.000000e+09 : f32
      %239 = vector.broadcast %cst_43 : f32 to vector<8x16xf32>
      %240 = arith.select %18, %238, %239 : vector<8x16xi1>, vector<8x16xf32>
      %cst_44 = arith.constant dense<0xFF800000> : vector<8xf32>
      %241 = vector.multi_reduction <maximumf>, %240, %cst_44 [1] : vector<8x16xf32> to vector<8xf32>
      %242 = vector.shape_cast %241 : vector<8xf32> to vector<8x1xf32>
      %243 = vector.broadcast %242 : vector<8x1xf32> to vector<8x16xf32>
      %244 = arith.subf %240, %243 : vector<8x16xf32>
      %245 = math.exp %244 : vector<8x16xf32>
      %cst_45 = arith.constant 0.000000e+00 : f32
      %246 = vector.broadcast %cst_45 : f32 to vector<8x16xf32>
      %247 = arith.select %18, %245, %246 : vector<8x16xi1>, vector<8x16xf32>
      %cst_46 = arith.constant dense<0.000000e+00> : vector<8xf32>
      %248 = vector.multi_reduction <add>, %247, %cst_46 [1] : vector<8x16xf32> to vector<8xf32>
      %249 = vector.shape_cast %248 : vector<8xf32> to vector<8x1xf32>
      %cst_47 = arith.constant 0.000000e+00 : f32
      %250 = vector.broadcast %cst_47 : f32 to vector<8x1xf32>
      %251 = arith.cmpf ogt, %249, %250 : vector<8x1xf32>
      %cst_48 = arith.constant 1.000000e+00 : f32
      %252 = vector.broadcast %cst_48 : f32 to vector<8x1xf32>
      %253 = arith.select %251, %249, %252 : vector<8x1xi1>, vector<8x1xf32>
      %254 = vector.broadcast %253 : vector<8x1xf32> to vector<8x16xf32>
      %255 = arith.divf %247, %254 : vector<8x16xf32>
      %256 = vector.extract_strided_slice %21 {offsets = [0, 16], sizes = [16, 8], strides = [1, 1]} : vector<16x32xf32> to vector<16x8xf32>
      %cst_49 = arith.constant dense<0.000000e+00> : vector<8x8xf32>
      %257 = tpu.matmul %255, %256, %cst_49 {dimension_numbers = #tpu.dot_dimension_numbers<[1], [0], [0], [1], [0, 0, 1, 1], [], []>} : vector<8x16xf32>, vector<16x8xf32>, vector<8x8xf32> -> vector<8x8xf32>
      %cst_50 = arith.constant 8.500000e-01 : f32
      %258 = vector.broadcast %cst_50 : f32 to vector<8x8xf32>
      %259 = arith.mulf %258, %257 : vector<8x8xf32>
      %260 = vector.extract_strided_slice %23 {offsets = [0, 16], sizes = [8, 8], strides = [1, 1]} : vector<8x32xf32> to vector<8x8xf32>
      %cst_51 = arith.constant 1.500000e-01 : f32
      %261 = vector.broadcast %cst_51 : f32 to vector<8x8xf32>
      %262 = arith.mulf %261, %260 : vector<8x8xf32>
      %263 = arith.addf %259, %262 : vector<8x8xf32>
      %264 = vector.extract_strided_slice %30 {offsets = [0, 3], sizes = [1, 1], strides = [1, 1]} : vector<8x4xf32> to vector<1x1xf32>
      %265 = vector.broadcast %264 : vector<1x1xf32> to vector<8x16xf32>
      %266 = arith.mulf %34, %265 : vector<8x16xf32>
      %267 = vector.extract_strided_slice %30 {offsets = [1, 3], sizes = [1, 1], strides = [1, 1]} : vector<8x4xf32> to vector<1x1xf32>
      %268 = vector.broadcast %267 : vector<1x1xf32> to vector<8x16xf32>
      %269 = arith.mulf %38, %268 : vector<8x16xf32>
      %270 = arith.addf %266, %269 : vector<8x16xf32>
      %271 = vector.extract_strided_slice %30 {offsets = [2, 3], sizes = [1, 1], strides = [1, 1]} : vector<8x4xf32> to vector<1x1xf32>
      %272 = vector.broadcast %271 : vector<1x1xf32> to vector<8x16xf32>
      %273 = arith.mulf %42, %272 : vector<8x16xf32>
      %274 = arith.addf %270, %273 : vector<8x16xf32>
      %275 = vector.extract_strided_slice %30 {offsets = [3, 3], sizes = [1, 1], strides = [1, 1]} : vector<8x4xf32> to vector<1x1xf32>
      %276 = vector.broadcast %275 : vector<1x1xf32> to vector<8x16xf32>
      %277 = arith.mulf %46, %276 : vector<8x16xf32>
      %278 = arith.addf %274, %277 : vector<8x16xf32>
      %279 = vector.extract_strided_slice %30 {offsets = [4, 3], sizes = [1, 1], strides = [1, 1]} : vector<8x4xf32> to vector<1x1xf32>
      %280 = vector.broadcast %279 : vector<1x1xf32> to vector<8x16xf32>
      %281 = arith.mulf %50, %280 : vector<8x16xf32>
      %282 = arith.addf %278, %281 : vector<8x16xf32>
      %283 = vector.extract_strided_slice %30 {offsets = [5, 3], sizes = [1, 1], strides = [1, 1]} : vector<8x4xf32> to vector<1x1xf32>
      %284 = vector.broadcast %283 : vector<1x1xf32> to vector<8x16xf32>
      %285 = arith.mulf %54, %284 : vector<8x16xf32>
      %286 = arith.addf %282, %285 : vector<8x16xf32>
      %287 = vector.extract_strided_slice %30 {offsets = [6, 3], sizes = [1, 1], strides = [1, 1]} : vector<8x4xf32> to vector<1x1xf32>
      %288 = vector.broadcast %287 : vector<1x1xf32> to vector<8x16xf32>
      %289 = arith.mulf %58, %288 : vector<8x16xf32>
      %290 = arith.addf %286, %289 : vector<8x16xf32>
      %291 = vector.extract_strided_slice %30 {offsets = [7, 3], sizes = [1, 1], strides = [1, 1]} : vector<8x4xf32> to vector<1x1xf32>
      %292 = vector.broadcast %291 : vector<1x1xf32> to vector<8x16xf32>
      %293 = arith.mulf %62, %292 : vector<8x16xf32>
      %294 = arith.addf %290, %293 : vector<8x16xf32>
      %295 = vector.extract_strided_slice %28 {offsets = [3, 0], sizes = [1, 16], strides = [1, 1]} : vector<4x16xf32> to vector<1x16xf32>
      %296 = vector.extract_strided_slice %29 {offsets = [0, 3], sizes = [8, 1], strides = [1, 1]} : vector<8x4xf32> to vector<8x1xf32>
      %297 = vector.broadcast %295 : vector<1x16xf32> to vector<8x16xf32>
      %298 = vector.broadcast %296 : vector<8x1xf32> to vector<8x16xf32>
      %299 = arith.addf %297, %298 : vector<8x16xf32>
      %300 = arith.addf %299, %294 : vector<8x16xf32>
      %cst_52 = arith.constant 0.000000e+00 : f32
      %301 = vector.broadcast %cst_52 : f32 to vector<8x16xf32>
      %302 = arith.cmpf oge, %300, %301 : vector<8x16xf32>
      %cst_53 = arith.constant 2.000000e-01 : f32
      %303 = vector.broadcast %cst_53 : f32 to vector<8x16xf32>
      %304 = arith.mulf %303, %300 : vector<8x16xf32>
      %305 = arith.select %302, %300, %304 : vector<8x16xi1>, vector<8x16xf32>
      %cst_54 = arith.constant -1.000000e+09 : f32
      %306 = vector.broadcast %cst_54 : f32 to vector<8x16xf32>
      %307 = arith.select %18, %305, %306 : vector<8x16xi1>, vector<8x16xf32>
      %cst_55 = arith.constant dense<0xFF800000> : vector<8xf32>
      %308 = vector.multi_reduction <maximumf>, %307, %cst_55 [1] : vector<8x16xf32> to vector<8xf32>
      %309 = vector.shape_cast %308 : vector<8xf32> to vector<8x1xf32>
      %310 = vector.broadcast %309 : vector<8x1xf32> to vector<8x16xf32>
      %311 = arith.subf %307, %310 : vector<8x16xf32>
      %312 = math.exp %311 : vector<8x16xf32>
      %cst_56 = arith.constant 0.000000e+00 : f32
      %313 = vector.broadcast %cst_56 : f32 to vector<8x16xf32>
      %314 = arith.select %18, %312, %313 : vector<8x16xi1>, vector<8x16xf32>
      %cst_57 = arith.constant dense<0.000000e+00> : vector<8xf32>
      %315 = vector.multi_reduction <add>, %314, %cst_57 [1] : vector<8x16xf32> to vector<8xf32>
      %316 = vector.shape_cast %315 : vector<8xf32> to vector<8x1xf32>
      %cst_58 = arith.constant 0.000000e+00 : f32
      %317 = vector.broadcast %cst_58 : f32 to vector<8x1xf32>
      %318 = arith.cmpf ogt, %316, %317 : vector<8x1xf32>
      %cst_59 = arith.constant 1.000000e+00 : f32
      %319 = vector.broadcast %cst_59 : f32 to vector<8x1xf32>
      %320 = arith.select %318, %316, %319 : vector<8x1xi1>, vector<8x1xf32>
      %321 = vector.broadcast %320 : vector<8x1xf32> to vector<8x16xf32>
      %322 = arith.divf %314, %321 : vector<8x16xf32>
      %323 = vector.extract_strided_slice %21 {offsets = [0, 24], sizes = [16, 8], strides = [1, 1]} : vector<16x32xf32> to vector<16x8xf32>
      %cst_60 = arith.constant dense<0.000000e+00> : vector<8x8xf32>
      %324 = tpu.matmul %322, %323, %cst_60 {dimension_numbers = #tpu.dot_dimension_numbers<[1], [0], [0], [1], [0, 0, 1, 1], [], []>} : vector<8x16xf32>, vector<16x8xf32>, vector<8x8xf32> -> vector<8x8xf32>
      %cst_61 = arith.constant 8.500000e-01 : f32
      %325 = vector.broadcast %cst_61 : f32 to vector<8x8xf32>
      %326 = arith.mulf %325, %324 : vector<8x8xf32>
      %327 = vector.extract_strided_slice %23 {offsets = [0, 24], sizes = [8, 8], strides = [1, 1]} : vector<8x32xf32> to vector<8x8xf32>
      %cst_62 = arith.constant 1.500000e-01 : f32
      %328 = vector.broadcast %cst_62 : f32 to vector<8x8xf32>
      %329 = arith.mulf %328, %327 : vector<8x8xf32>
      %330 = arith.addf %326, %329 : vector<8x8xf32>
      %331 = tpu.concatenate %129, %196, %263, %330 in 1 : vector<8x8xf32>, vector<8x8xf32>, vector<8x8xf32>, vector<8x8xf32> -> vector<8x32xf32>
      %332 = arith.index_cast %15 : i32 to index
      %333 = arith.index_cast %1 : i32 to index
      %c0_63 = arith.constant 0 : index
      %334 = vector.load %arg18[%332, %333, %c0_63] : memref<2x16x32xf32, #tpu.memory_space<vmem>>, vector<1x8x32xf32>
      %335 = vector.shape_cast %334 : vector<1x8x32xf32> to vector<8x32xf32>
      %336 = vector.shape_cast %331 : vector<8x32xf32> to vector<1x8x32xf32>
      tpu.vector_store %arg18[%332, %333, %c0_63], %336 {strides = array<i32>} : memref<2x16x32xf32, #tpu.memory_space<vmem>>, vector<1x8x32xf32>,
      %c3_i32_64 = arith.constant 3 : i32
      %337 = arith.cmpi eq, %arg0, %c3_i32_64 : i32
      %338 = arith.extui %337 : i1 to i32
      %c0_i32_65 = arith.constant 0 : i32
      %339 = arith.cmpi ne, %338, %c0_i32_65 : i32
      scf.if %339 {
        %c0_66 = arith.constant 0 : index
        %c0_67 = arith.constant 0 : index
        %340 = vector.load %arg2[%c0_66, %c0_67] : memref<8x48xf32, #tpu.memory_space<vmem>>, vector<8x48xf32>
        %c0_68 = arith.constant 0 : index
        %c0_69 = arith.constant 0 : index
        %341 = vector.load %arg7[%c0_68, %c0_69] : memref<32x32xf32, #tpu.memory_space<vmem>>, vector<32x32xf32>
        %cst_70 = arith.constant dense<0.000000e+00> : vector<8x32xf32>
        %342 = tpu.matmul %331, %341, %cst_70 {dimension_numbers = #tpu.dot_dimension_numbers<[1], [0], [0], [1], [0, 0, 1, 1], [], []>} : vector<8x32xf32>, vector<32x32xf32>, vector<8x32xf32> -> vector<8x32xf32>
        %c0_71 = arith.constant 0 : index
        %c0_72 = arith.constant 0 : index
        %343 = vector.load %arg8[%c0_71, %c0_72] : memref<48x32xf32, #tpu.memory_space<vmem>>, vector<48x32xf32>
        %cst_73 = arith.constant dense<0.000000e+00> : vector<8x32xf32>
        %344 = tpu.matmul %340, %343, %cst_73 {dimension_numbers = #tpu.dot_dimension_numbers<[1], [0], [0], [1], [0, 0, 1, 1], [], []>} : vector<8x48xf32>, vector<48x32xf32>, vector<8x32xf32> -> vector<8x32xf32>
        %cst_74 = arith.constant 5.000000e-01 : f32
        %345 = vector.broadcast %cst_74 : f32 to vector<8x32xf32>
        %346 = arith.mulf %345, %342 : vector<8x32xf32>
        %347 = arith.addf %344, %346 : vector<8x32xf32>
        %c0_75 = arith.constant 0 : index
        %c0_76 = arith.constant 0 : index
        %348 = vector.load %arg12[%c0_75, %c0_76] : memref<32x128xf32, #tpu.memory_space<vmem>>, vector<32x128xf32>
        %cst_77 = arith.constant dense<0.000000e+00> : vector<8x128xf32>
        %349 = tpu.matmul %347, %348, %cst_77 {dimension_numbers = #tpu.dot_dimension_numbers<[1], [0], [0], [1], [0, 0, 1, 1], [], []>} : vector<8x32xf32>, vector<32x128xf32>, vector<8x128xf32> -> vector<8x128xf32>
        %c0_78 = arith.constant 0 : index
        %c0_79 = arith.constant 0 : index
        %350 = vector.load %arg13[%c0_78, %c0_79] : memref<1x128xf32, #tpu.memory_space<vmem>>, vector<1x128xf32>
        %351 = vector.broadcast %350 : vector<1x128xf32> to vector<8x128xf32>
        %352 = arith.addf %349, %351 : vector<8x128xf32>
        %cst_80 = arith.constant 0.000000e+00 : f32
        %353 = vector.broadcast %cst_80 : f32 to vector<8x128xf32>
        %354 = arith.maximumf %352, %353 : vector<8x128xf32>
        %c0_81 = arith.constant 0 : index
        %c0_82 = arith.constant 0 : index
        %355 = vector.load %arg14[%c0_81, %c0_82] : memref<128x32xf32, #tpu.memory_space<vmem>>, vector<128x32xf32>
        %cst_83 = arith.constant dense<0.000000e+00> : vector<8x32xf32>
        %356 = tpu.matmul %354, %355, %cst_83 {dimension_numbers = #tpu.dot_dimension_numbers<[1], [0], [0], [1], [0, 0, 1, 1], [], []>} : vector<8x128xf32>, vector<128x32xf32>, vector<8x32xf32> -> vector<8x32xf32>
        %c0_84 = arith.constant 0 : index
        %c0_85 = arith.constant 0 : index
        %357 = vector.load %arg15[%c0_84, %c0_85] : memref<1x32xf32, #tpu.memory_space<vmem>>, vector<1x32xf32>
        %358 = vector.broadcast %357 : vector<1x32xf32> to vector<8x32xf32>
        %359 = arith.addf %356, %358 : vector<8x32xf32>
        %cst_86 = arith.constant 2.500000e-01 : f32
        %360 = vector.broadcast %cst_86 : f32 to vector<8x32xf32>
        %361 = arith.mulf %360, %359 : vector<8x32xf32>
        %362 = arith.addf %347, %361 : vector<8x32xf32>
        %c0_87 = arith.constant 0 : index
        %c0_88 = arith.constant 0 : index
        %363 = vector.load %arg16[%c0_87, %c0_88] : memref<8x32xf32, #tpu.memory_space<vmem>>, vector<8x32xf32>
        tpu.vector_store %arg16[%c0_87, %c0_88], %362 {strides = array<i32>} : memref<8x32xf32, #tpu.memory_space<vmem>>, vector<8x32xf32>,
      } else {
      }
    } else {
    }
    %c3_i32 = arith.constant 3 : i32
    %8 = arith.cmpi eq, %arg0, %c3_i32 : i32
    %c1_i32 = arith.constant 1 : i32
    %9 = arith.cmpi eq, %arg1, %c1_i32 : i32
    %10 = arith.andi %8, %9 : i1
    %11 = arith.extui %10 : i1 to i32
    %c0_i32_3 = arith.constant 0 : i32
    %12 = arith.cmpi ne, %11, %c0_i32_3 : i32
    scf.if %12 {
      %c0 = arith.constant 0 : index
      %c0_4 = arith.constant 0 : index
      %13 = vector.load %arg3[%c0, %c0_4] : memref<8x40xf32, #tpu.memory_space<vmem>>, vector<8x40xf32>
      %c0_5 = arith.constant 0 : index
      %c0_6 = arith.constant 0 : index
      %14 = vector.load %arg6[%c0_5, %c0_6] : memref<40x32xf32, #tpu.memory_space<vmem>>, vector<40x32xf32>
      %cst = arith.constant dense<0.000000e+00> : vector<8x32xf32>
      %15 = tpu.matmul %13, %14, %cst {dimension_numbers = #tpu.dot_dimension_numbers<[1], [0], [0], [1], [0, 0, 1, 1], [], []>} : vector<8x40xf32>, vector<40x32xf32>, vector<8x32xf32> -> vector<8x32xf32>
      %c0_7 = arith.constant 0 : index
      %c0_8 = arith.constant 0 : index
      %16 = vector.load %arg3[%c0_7, %c0_8] : memref<8x40xf32, #tpu.memory_space<vmem>>, vector<8x40xf32>
      %c0_9 = arith.constant 0 : index
      %c0_10 = arith.constant 0 : index
      %17 = vector.load %arg9[%c0_9, %c0_10] : memref<40x32xf32, #tpu.memory_space<vmem>>, vector<40x32xf32>
      %cst_11 = arith.constant dense<0.000000e+00> : vector<8x32xf32>
      %18 = tpu.matmul %16, %17, %cst_11 {dimension_numbers = #tpu.dot_dimension_numbers<[1], [0], [0], [1], [0, 0, 1, 1], [], []>} : vector<8x40xf32>, vector<40x32xf32>, vector<8x32xf32> -> vector<8x32xf32>
      %cst_12 = arith.constant 5.000000e-01 : f32
      %19 = vector.broadcast %cst_12 : f32 to vector<8x32xf32>
      %20 = arith.mulf %19, %15 : vector<8x32xf32>
      %21 = arith.addf %18, %20 : vector<8x32xf32>
      %c0_13 = arith.constant 0 : index
      %c0_14 = arith.constant 0 : index
      %22 = vector.load %arg17[%c0_13, %c0_14] : memref<8x32xf32, #tpu.memory_space<vmem>>, vector<8x32xf32>
      tpu.vector_store %arg17[%c0_13, %c0_14], %21 {strides = array<i32>} : memref<8x32xf32, #tpu.memory_space<vmem>>, vector<8x32xf32>,
    } else {
    }
    return
  }
  func.func @transform_0(%arg0: i32, %arg1: i32) -> (i32, i32) {
    %c0_i32 = arith.constant 0 : i32
    %c0_i32_0 = arith.constant 0 : i32
    return %arg1, %c0_i32 : i32, i32
  }
  func.func @transform_1(%arg0: i32, %arg1: i32) -> (i32, i32) {
    %c0_i32 = arith.constant 0 : i32
    %c0_i32_0 = arith.constant 0 : i32
    %c0_i32_1 = arith.constant 0 : i32
    return %c0_i32, %c0_i32_0 : i32, i32
  }
  func.func @transform_2(%arg0: i32, %arg1: i32) -> (i32, i32) {
    %c0_i32 = arith.constant 0 : i32
    %c0_i32_0 = arith.constant 0 : i32
    return %arg1, %c0_i32 : i32, i32
  }
  func.func @transform_3(%arg0: i32, %arg1: i32) -> (i32, i32) {
    %c0_i32 = arith.constant 0 : i32
    %c0_i32_0 = arith.constant 0 : i32
    %c0_i32_1 = arith.constant 0 : i32
    return %c0_i32, %c0_i32_0 : i32, i32
  }
  func.func @transform_4(%arg0: i32, %arg1: i32) -> (i32, i32) {
    %c0_i32 = arith.constant 0 : i32
    %c0_i32_0 = arith.constant 0 : i32
    %c0_i32_1 = arith.constant 0 : i32
    return %c0_i32, %c0_i32_0 : i32, i32
  }
  func.func @transform_5(%arg0: i32, %arg1: i32) -> (i32, i32) {
    %c0_i32 = arith.constant 0 : i32
    %c0_i32_0 = arith.constant 0 : i32
    %c0_i32_1 = arith.constant 0 : i32
    return %c0_i32, %c0_i32_0 : i32, i32
  }
  func.func @transform_6(%arg0: i32, %arg1: i32) -> (i32, i32) {
    %c0_i32 = arith.constant 0 : i32
    %c0_i32_0 = arith.constant 0 : i32
    %c0_i32_1 = arith.constant 0 : i32
    return %c0_i32, %c0_i32_0 : i32, i32
  }
  func.func @transform_7(%arg0: i32, %arg1: i32) -> (i32, i32) {
    %c0_i32 = arith.constant 0 : i32
    %c0_i32_0 = arith.constant 0 : i32
    %c0_i32_1 = arith.constant 0 : i32
    return %c0_i32, %c0_i32_0 : i32, i32
  }
  func.func @transform_8(%arg0: i32, %arg1: i32) -> (i32, i32) {
    %c0_i32 = arith.constant 0 : i32
    %c0_i32_0 = arith.constant 0 : i32
    %c0_i32_1 = arith.constant 0 : i32
    return %c0_i32, %c0_i32_0 : i32, i32
  }
  func.func @transform_9(%arg0: i32, %arg1: i32) -> (i32, i32) {
    %c0_i32 = arith.constant 0 : i32
    %c0_i32_0 = arith.constant 0 : i32
    %c0_i32_1 = arith.constant 0 : i32
    return %c0_i32, %c0_i32_0 : i32, i32
  }
  func.func @transform_10(%arg0: i32, %arg1: i32) -> (i32, i32) {
    %c0_i32 = arith.constant 0 : i32
    %c0_i32_0 = arith.constant 0 : i32
    %c0_i32_1 = arith.constant 0 : i32
    return %c0_i32, %c0_i32_0 : i32, i32
  }
  func.func @transform_11(%arg0: i32, %arg1: i32) -> (i32, i32) {
    %c0_i32 = arith.constant 0 : i32
    %c0_i32_0 = arith.constant 0 : i32
    %c0_i32_1 = arith.constant 0 : i32
    return %c0_i32, %c0_i32_0 : i32, i32
  }
  func.func @transform_12(%arg0: i32, %arg1: i32) -> (i32, i32) {
    %c0_i32 = arith.constant 0 : i32
    %c0_i32_0 = arith.constant 0 : i32
    %c0_i32_1 = arith.constant 0 : i32
    return %c0_i32, %c0_i32_0 : i32, i32
  }
  func.func @transform_13(%arg0: i32, %arg1: i32) -> (i32, i32) {
    %c0_i32 = arith.constant 0 : i32
    %c0_i32_0 = arith.constant 0 : i32
    %c0_i32_1 = arith.constant 0 : i32
    return %c0_i32, %c0_i32_0 : i32, i32
  }
  func.func @transform_14(%arg0: i32, %arg1: i32) -> (i32, i32) {
    %c0_i32 = arith.constant 0 : i32
    %c0_i32_0 = arith.constant 0 : i32
    return %arg1, %c0_i32 : i32, i32
  }
  func.func @transform_15(%arg0: i32, %arg1: i32) -> (i32, i32) {
    %c0_i32 = arith.constant 0 : i32
    %c0_i32_0 = arith.constant 0 : i32
    %c0_i32_1 = arith.constant 0 : i32
    return %c0_i32, %c0_i32_0 : i32, i32
  }
}

</mosaic_0001>

<llo_original>
// kernel: tpu_custom_call.1
$region0: #{tpu_custom_call.1}
  #allocation0 [shape = 'u32[]', space=smem, size = 0x4, offset = 0x4, fixed_abs, tag = 'smem constant byte address 0x4 - core index']
  #allocation1 [shape = 'u32[72,128]{1,0:T(1,128)}', space=vmem, size = 0x9000, scoped, tag = 'internal scratch']
  #allocation2 [shape = 'f32[2,16,32]{2,1,0:T(8,128)}', space=vmem, size = 0x4000, scoped, tag = 'scratch operand']
  #allocation3 [shape = 'f32[16,32]{1,0:T(8,128)}', space=vmem, size = 0x2000, scoped, tag = 'scratch operand']
  #allocation4 [shape = 'f32[16,8]{1,0:T(8,128)}', space=vmem, size = 0x2000, scoped, tag = 'scratch operand']
  #allocation5 [shape = 'f32[8,4]{1,0:T(8,128)}', space=vmem, size = 0x1000, scoped, tag = 'scratch operand']
  %s0 = inlined_call_operand.vmem [shape: f32[16,48], index: 0, kind: input, shape index: {}]
  %s1 = inlined_call_operand.vmem [shape: f32[8,40], index: 1, kind: input, shape index: {}]
  %s2 = inlined_call_operand.vmem [shape: s32[16,16], index: 2, kind: input, shape index: {}]
  %s3 = inlined_call_operand.vmem [shape: f32[48,32], index: 3, kind: input, shape index: {}]
  %s4 = inlined_call_operand.vmem [shape: f32[40,32], index: 4, kind: input, shape index: {}]
  %s5 = inlined_call_operand.vmem [shape: f32[32,32], index: 5, kind: input, shape index: {}]
  %s6 = inlined_call_operand.vmem [shape: f32[48,32], index: 6, kind: input, shape index: {}]
  %s7 = inlined_call_operand.vmem [shape: f32[40,32], index: 7, kind: input, shape index: {}]
  %s8 = inlined_call_operand.vmem [shape: f32[32,8], index: 8, kind: input, shape index: {}]
  %s9 = inlined_call_operand.vmem [shape: f32[32,4], index: 9, kind: input, shape index: {}]
  %s10 = inlined_call_operand.vmem [shape: f32[32,128], index: 10, kind: input, shape index: {}]
  %s11 = inlined_call_operand.vmem [shape: f32[1,128], index: 11, kind: input, shape index: {}]
  %s12 = inlined_call_operand.vmem [shape: f32[128,32], index: 12, kind: input, shape index: {}]
  %s13 = inlined_call_operand.vmem [shape: f32[1,32], index: 13, kind: input, shape index: {}]
  %s14 = inlined_call_operand.hbm [shape: f32[16,32], index: 14, kind: output, shape index: {0}]
  %s15 = inlined_call_operand.hbm [shape: f32[8,32], index: 15, kind: output, shape index: {1}]
  %16 = xla_tuple %s14, %s15
  %s17 = sld [smem:[#allocation0]]
  $region117: #{tpu_custom_call.1} parent=0
    _
  %s19 = ssub.s32 1, %s17
  %s20 = scalar_select 0, %s19, %s17
  $region1: #{tpu_custom_call.1} parent=0
    #allocation6 [shape = 'u8[8192]{0}', space=vmem, size = 0x2000, scoped, tag = 'output window, operand 0']
    #allocation7 [shape = 's32[2]{0}', space=sflag, size = 0x8, scoped, tag = 'scoped memory for tpu_custom_call.1']
    #allocation8 [shape = 'u8[4096]{0}', space=vmem, size = 0x1000, scoped, tag = 'output window, operand 1, single buffered']
    #allocation9 [shape = 's32[1]{0}', space=sflag, size = 0x4, scoped, tag = 'scoped memory for tpu_custom_call.1']
    %21 = vsyncpa [#allocation7], 0
    %s22 = scalar_lea.sflag [#allocation7], 1
    %23 = vsyncpa %s22, 0
    %24 = vsyncpa [#allocation9], 0
    loop: start=0, step=1, limit=10
    $region2: #{tpu_custom_call.1} parent=1 // loop_pre_header
      _
    $region3: #{tpu_custom_call.1} parent=1 // loop_header
      %s26 = sphi 0, %s30
      %p27 = scmp.ge.s32.totalorder %s26, 10
      %s33 = sphi 0, %s45
      %s34 = sphi 0, %s41
      %s35 = sphi 0, %s33
      %s36 = sphi 0, %s34
      %s37 = sphi 0, %s35
      %s38 = sphi 0, %s36
      %s48 = sphi 0, %s50
      %s51 = sphi 0, %s48
      %s52 = sphi 0, %s51
      %s68 = sphi 0, %s52
      %s72 = sphi 0, %s72
      %s74 = sphi 0, %s72
      %s75 = sphi 0, %s74
      %s89 = sphi 0, %s75
      %s95 = sphi 0, %s97
      %s98 = sphi 0, %s95
      %s99 = sphi 0, %s98
      %s115 = sphi 0, %s99
      %s119 = sphi 0, %s119
      %s121 = sphi 0, %s119
      %s122 = sphi 0, %s121
      %s136 = sphi 0, %s122
      %s140 = sphi 0, %s140
      %s142 = sphi 0, %s140
      %s143 = sphi 0, %s142
      %s157 = sphi 0, %s143
      %s161 = sphi 0, %s161
      %s163 = sphi 0, %s161
      %s164 = sphi 0, %s163
      %s178 = sphi 0, %s164
      %s182 = sphi 0, %s182
      %s184 = sphi 0, %s182
      %s185 = sphi 0, %s184
      %s199 = sphi 0, %s185
      %s203 = sphi 0, %s203
      %s205 = sphi 0, %s203
      %s206 = sphi 0, %s205
      %s220 = sphi 0, %s206
      %s224 = sphi 0, %s224
      %s226 = sphi 0, %s224
      %s227 = sphi 0, %s226
      %s241 = sphi 0, %s227
      %s245 = sphi 0, %s245
      %s247 = sphi 0, %s245
      %s248 = sphi 0, %s247
      %s262 = sphi 0, %s248
      %s266 = sphi 0, %s266
      %s268 = sphi 0, %s266
      %s269 = sphi 0, %s268
      %s283 = sphi 0, %s269
      %s287 = sphi 0, %s287
      %s289 = sphi 0, %s287
      %s290 = sphi 0, %s289
      %s304 = sphi 0, %s290
      %s308 = sphi 0, %s308
      %s310 = sphi 0, %s308
      %s311 = sphi 0, %s310
      %s325 = sphi 0, %s311
      %s329 = sphi 0, %s329
      %s331 = sphi 0, %s329
      %s332 = sphi 0, %s331
      %s346 = sphi 0, %s332
      %s352 = sphi 0, %s354
      %s355 = sphi 0, %s352
      %s356 = sphi 0, %s355
      %s372 = sphi 0, %s356
      %s376 = sphi 0, %s376
      %s378 = sphi 0, %s376
      %s379 = sphi 0, %s378
      %s393 = sphi 0, %s379
    $region4: #{tpu_custom_call.1} parent=1 // loop_header_branch
      %29 = sbr.rel (%p27) target = $region8
    $region5: #{tpu_custom_call.1} parent=1 // loop_body
      %s31 = ssub.s32 %s26, 1
      %s32 = ssub.s32 %s26, 2
      %s39 = sadd.s32 1, %s34
      %p40 = scmp.ge.s32.totalorder %s39, 2
      %s41 = scalar_select %p40, 0, %s39
      %s42 = sadd.s32 1, %s33
      %s43 = scalar_select %p40, %s42, %s33
      %p44 = scmp.ge.s32.totalorder %s43, 4
      %s45 = scalar_select %p44, 0, %s43
      %s46 = ssub.s32 %s34, %s41
      %p47 = scmp.eq.s32.totalorder %s46, 0
      %s49 = sadd.s32 %s48, 1
      %s50 = scalar_select %p47, %s48, %s49
      %p53 = pneg %p47
      %p54 = scmp.eq.s32.totalorder %s26, 7
      %p55 = por %p53, %p54
      %p56 = scmp.ne.s32.totalorder %s48, %s51
      %p57 = scmp.eq.s32.totalorder %s26, 0
      %p58 = por %p56, %p57
      %p59 = scmp.ne.s32.totalorder %s48, %s51
      %p60 = scmp.eq.s32.totalorder %s31, 7
      %p61 = por %p59, %p60
      %p62 = scmp.ne.s32.totalorder %s51, %s52
      %p63 = scmp.eq.s32.totalorder %s31, 0
      %p64 = por %p62, %p63
      %p65 = scmp.ne.s32.totalorder %s51, %s52
      %p66 = scmp.eq.s32.totalorder %s32, 7
      %p67 = por %p65, %p66
      %p69 = scmp.ne.s32.totalorder %s52, %s68
      %p70 = scmp.eq.s32.totalorder %s32, 0
      %p71 = por %p69, %p70
      %s73 = sadd.s32 %s72, 1
      %p76 = scmp.eq.s32.totalorder %s26, 7
      %p77 = scmp.ne.s32.totalorder %s72, %s74
      %p78 = scmp.eq.s32.totalorder %s26, 0
      %p79 = por %p77, %p78
      %p80 = scmp.ne.s32.totalorder %s72, %s74
      %p81 = scmp.eq.s32.totalorder %s31, 7
      %p82 = por %p80, %p81
      %p83 = scmp.ne.s32.totalorder %s74, %s75
      %p84 = scmp.eq.s32.totalorder %s31, 0
      %p85 = por %p83, %p84
      %p86 = scmp.ne.s32.totalorder %s74, %s75
      %p87 = scmp.eq.s32.totalorder %s32, 7
      %p88 = por %p86, %p87
      %p90 = scmp.ne.s32.totalorder %s75, %s89
      %p91 = scmp.eq.s32.totalorder %s32, 0
      %p92 = por %p90, %p91
      %s93 = ssub.s32 %s34, %s41
      %p94 = scmp.eq.s32.totalorder %s93, 0
      %s96 = sadd.s32 %s95, 1
      %s97 = scalar_select %p94, %s95, %s96
      %p100 = pneg %p94
      %p101 = scmp.eq.s32.totalorder %s26, 7
      %p102 = por %p100, %p101
      %p103 = scmp.ne.s32.totalorder %s95, %s98
      %p104 = scmp.eq.s32.totalorder %s26, 0
      %p105 = por %p103, %p104
      %p106 = scmp.ne.s32.totalorder %s95, %s98
      %p107 = scmp.eq.s32.totalorder %s31, 7
      %p108 = por %p106, %p107
      %p109 = scmp.ne.s32.totalorder %s98, %s99
      %p110 = scmp.eq.s32.totalorder %s31, 0
      %p111 = por %p109, %p110
      %p112 = scmp.ne.s32.totalorder %s98, %s99
      %p113 = scmp.eq.s32.totalorder %s32, 7
      %p114 = por %p112, %p113
      %p116 = scmp.ne.s32.totalorder %s99, %s115
      %p117 = scmp.eq.s32.totalorder %s32, 0
      %p118 = por %p116, %p117
      %s120 = sadd.s32 %s119, 1
      %p123 = scmp.eq.s32.totalorder %s26, 7
      %p124 = scmp.ne.s32.totalorder %s119, %s121
      %p125 = scmp.eq.s32.totalorder %s26, 0
      %p126 = por %p124, %p125
      %p127 = scmp.ne.s32.totalorder %s119, %s121
      %p128 = scmp.eq.s32.totalorder %s31, 7
      %p129 = por %p127, %p128
      %p130 = scmp.ne.s32.totalorder %s121, %s122
      %p131 = scmp.eq.s32.totalorder %s31, 0
      %p132 = por %p130, %p131
      %p133 = scmp.ne.s32.totalorder %s121, %s122
      %p134 = scmp.eq.s32.totalorder %s32, 7
      %p135 = por %p133, %p134
      %p137 = scmp.ne.s32.totalorder %s122, %s136
      %p138 = scmp.eq.s32.totalorder %s32, 0
      %p139 = por %p137, %p138
      %s141 = sadd.s32 %s140, 1
      %p144 = scmp.eq.s32.totalorder %s26, 7
      %p145 = scmp.ne.s32.totalorder %s140, %s142
      %p146 = scmp.eq.s32.totalorder %s26, 0
      %p147 = por %p145, %p146
      %p148 = scmp.ne.s32.totalorder %s140, %s142
      %p149 = scmp.eq.s32.totalorder %s31, 7
      %p150 = por %p148, %p149
      %p151 = scmp.ne.s32.totalorder %s142, %s143
      %p152 = scmp.eq.s32.totalorder %s31, 0
      %p153 = por %p151, %p152
      %p154 = scmp.ne.s32.totalorder %s142, %s143
      %p155 = scmp.eq.s32.totalorder %s32, 7
      %p156 = por %p154, %p155
      %p158 = scmp.ne.s32.totalorder %s143, %s157
      %p159 = scmp.eq.s32.totalorder %s32, 0
      %p160 = por %p158, %p159
      %s162 = sadd.s32 %s161, 1
      %p165 = scmp.eq.s32.totalorder %s26, 7
      %p166 = scmp.ne.s32.totalorder %s161, %s163
      %p167 = scmp.eq.s32.totalorder %s26, 0
      %p168 = por %p166, %p167
      %p169 = scmp.ne.s32.totalorder %s161, %s163
      %p170 = scmp.eq.s32.totalorder %s31, 7
      %p171 = por %p169, %p170
      %p172 = scmp.ne.s32.totalorder %s163, %s164
      %p173 = scmp.eq.s32.totalorder %s31, 0
      %p174 = por %p172, %p173
      %p175 = scmp.ne.s32.totalorder %s163, %s164
      %p176 = scmp.eq.s32.totalorder %s32, 7
      %p177 = por %p175, %p176
      %p179 = scmp.ne.s32.totalorder %s164, %s178
      %p180 = scmp.eq.s32.totalorder %s32, 0
      %p181 = por %p179, %p180
      %s183 = sadd.s32 %s182, 1
      %p186 = scmp.eq.s32.totalorder %s26, 7
      %p187 = scmp.ne.s32.totalorder %s182, %s184
      %p188 = scmp.eq.s32.totalorder %s26, 0
      %p189 = por %p187, %p188
      %p190 = scmp.ne.s32.totalorder %s182, %s184
      %p191 = scmp.eq.s32.totalorder %s31, 7
      %p192 = por %p190, %p191
      %p193 = scmp.ne.s32.totalorder %s184, %s185
      %p194 = scmp.eq.s32.totalorder %s31, 0
      %p195 = por %p193, %p194
      %p196 = scmp.ne.s32.totalorder %s184, %s185
      %p197 = scmp.eq.s32.totalorder %s32, 7
      %p198 = por %p196, %p197
      %p200 = scmp.ne.s32.totalorder %s185, %s199
      %p201 = scmp.eq.s32.totalorder %s32, 0
      %p202 = por %p200, %p201
      %s204 = sadd.s32 %s203, 1
      %p207 = scmp.eq.s32.totalorder %s26, 7
      %p208 = scmp.ne.s32.totalorder %s203, %s205
      %p209 = scmp.eq.s32.totalorder %s26, 0
      %p210 = por %p208, %p209
      %p211 = scmp.ne.s32.totalorder %s203, %s205
      %p212 = scmp.eq.s32.totalorder %s31, 7
      %p213 = por %p211, %p212
      %p214 = scmp.ne.s32.totalorder %s205, %s206
      %p215 = scmp.eq.s32.totalorder %s31, 0
      %p216 = por %p214, %p215
      %p217 = scmp.ne.s32.totalorder %s205, %s206
      %p218 = scmp.eq.s32.totalorder %s32, 7
      %p219 = por %p217, %p218
      %p221 = scmp.ne.s32.totalorder %s206, %s220
      %p222 = scmp.eq.s32.totalorder %s32, 0
      %p223 = por %p221, %p222
      %s225 = sadd.s32 %s224, 1
      %p228 = scmp.eq.s32.totalorder %s26, 7
      %p229 = scmp.ne.s32.totalorder %s224, %s226
      %p230 = scmp.eq.s32.totalorder %s26, 0
      %p231 = por %p229, %p230
      %p232 = scmp.ne.s32.totalorder %s224, %s226
      %p233 = scmp.eq.s32.totalorder %s31, 7
      %p234 = por %p232, %p233
      %p235 = scmp.ne.s32.totalorder %s226, %s227
      %p236 = scmp.eq.s32.totalorder %s31, 0
      %p237 = por %p235, %p236
      %p238 = scmp.ne.s32.totalorder %s226, %s227
      %p239 = scmp.eq.s32.totalorder %s32, 7
      %p240 = por %p238, %p239
      %p242 = scmp.ne.s32.totalorder %s227, %s241
      %p243 = scmp.eq.s32.totalorder %s32, 0
      %p244 = por %p242, %p243
      %s246 = sadd.s32 %s245, 1
      %p249 = scmp.eq.s32.totalorder %s26, 7
      %p250 = scmp.ne.s32.totalorder %s245, %s247
      %p251 = scmp.eq.s32.totalorder %s26, 0
      %p252 = por %p250, %p251
      %p253 = scmp.ne.s32.totalorder %s245, %s247
      %p254 = scmp.eq.s32.totalorder %s31, 7
      %p255 = por %p253, %p254
      %p256 = scmp.ne.s32.totalorder %s247, %s248
      %p257 = scmp.eq.s32.totalorder %s31, 0
      %p258 = por %p256, %p257
      %p259 = scmp.ne.s32.totalorder %s247, %s248
      %p260 = scmp.eq.s32.totalorder %s32, 7
      %p261 = por %p259, %p260
      %p263 = scmp.ne.s32.totalorder %s248, %s262
      %p264 = scmp.eq.s32.totalorder %s32, 0
      %p265 = por %p263, %p264
      %s267 = sadd.s32 %s266, 1
      %p270 = scmp.eq.s32.totalorder %s26, 7
      %p271 = scmp.ne.s32.totalorder %s266, %s268
      %p272 = scmp.eq.s32.totalorder %s26, 0
      %p273 = por %p271, %p272
      %p274 = scmp.ne.s32.totalorder %s266, %s268
      %p275 = scmp.eq.s32.totalorder %s31, 7
      %p276 = por %p274, %p275
      %p277 = scmp.ne.s32.totalorder %s268, %s269
      %p278 = scmp.eq.s32.totalorder %s31, 0
      %p279 = por %p277, %p278
      %p280 = scmp.ne.s32.totalorder %s268, %s269
      %p281 = scmp.eq.s32.totalorder %s32, 7
      %p282 = por %p280, %p281
      %p284 = scmp.ne.s32.totalorder %s269, %s283
      %p285 = scmp.eq.s32.totalorder %s32, 0
      %p286 = por %p284, %p285
      %s288 = sadd.s32 %s287, 1
      %p291 = scmp.eq.s32.totalorder %s26, 7
      %p292 = scmp.ne.s32.totalorder %s287, %s289
      %p293 = scmp.eq.s32.totalorder %s26, 0
      %p294 = por %p292, %p293
      %p295 = scmp.ne.s32.totalorder %s287, %s289
      %p296 = scmp.eq.s32.totalorder %s31, 7
      %p297 = por %p295, %p296
      %p298 = scmp.ne.s32.totalorder %s289, %s290
      %p299 = scmp.eq.s32.totalorder %s31, 0
      %p300 = por %p298, %p299
      %p301 = scmp.ne.s32.totalorder %s289, %s290
      %p302 = scmp.eq.s32.totalorder %s32, 7
      %p303 = por %p301, %p302
      %p305 = scmp.ne.s32.totalorder %s290, %s304
      %p306 = scmp.eq.s32.totalorder %s32, 0
      %p307 = por %p305, %p306
      %s309 = sadd.s32 %s308, 1
      %p312 = scmp.eq.s32.totalorder %s26, 7
      %p313 = scmp.ne.s32.totalorder %s308, %s310
      %p314 = scmp.eq.s32.totalorder %s26, 0
      %p315 = por %p313, %p314
      %p316 = scmp.ne.s32.totalorder %s308, %s310
      %p317 = scmp.eq.s32.totalorder %s31, 7
      %p318 = por %p316, %p317
      %p319 = scmp.ne.s32.totalorder %s310, %s311
      %p320 = scmp.eq.s32.totalorder %s31, 0
      %p321 = por %p319, %p320
      %p322 = scmp.ne.s32.totalorder %s310, %s311
      %p323 = scmp.eq.s32.totalorder %s32, 7
      %p324 = por %p322, %p323
      %p326 = scmp.ne.s32.totalorder %s311, %s325
      %p327 = scmp.eq.s32.totalorder %s32, 0
      %p328 = por %p326, %p327
      %s330 = sadd.s32 %s329, 1
      %p333 = scmp.eq.s32.totalorder %s26, 7
      %p334 = scmp.ne.s32.totalorder %s329, %s331
      %p335 = scmp.eq.s32.totalorder %s26, 0
      %p336 = por %p334, %p335
      %p337 = scmp.ne.s32.totalorder %s329, %s331
      %p338 = scmp.eq.s32.totalorder %s31, 7
      %p339 = por %p337, %p338
      %p340 = scmp.ne.s32.totalorder %s331, %s332
      %p341 = scmp.eq.s32.totalorder %s31, 0
      %p342 = por %p340, %p341
      %p343 = scmp.ne.s32.totalorder %s331, %s332
      %p344 = scmp.eq.s32.totalorder %s32, 7
      %p345 = por %p343, %p344
      %p347 = scmp.ne.s32.totalorder %s332, %s346
      %p348 = scmp.eq.s32.totalorder %s32, 0
      %p349 = por %p347, %p348
      %s350 = ssub.s32 %s34, %s41
      %p351 = scmp.eq.s32.totalorder %s350, 0
      %s353 = sadd.s32 %s352, 1
      %s354 = scalar_select %p351, %s352, %s353
      %p357 = pneg %p351
      %p358 = scmp.eq.s32.totalorder %s26, 7
      %p359 = por %p357, %p358
      %p360 = scmp.ne.s32.totalorder %s352, %s355
      %p361 = scmp.eq.s32.totalorder %s26, 0
      %p362 = por %p360, %p361
      %p363 = scmp.ne.s32.totalorder %s352, %s355
      %p364 = scmp.eq.s32.totalorder %s31, 7
      %p365 = por %p363, %p364
      %p366 = scmp.ne.s32.totalorder %s355, %s356
      %p367 = scmp.eq.s32.totalorder %s31, 0
      %p368 = por %p366, %p367
      %p369 = scmp.ne.s32.totalorder %s355, %s356
      %p370 = scmp.eq.s32.totalorder %s32, 7
      %p371 = por %p369, %p370
      %p373 = scmp.ne.s32.totalorder %s356, %s372
      %p374 = scmp.eq.s32.totalorder %s32, 0
      %p375 = por %p373, %p374
      %s377 = sadd.s32 %s376, 1
      %p380 = scmp.eq.s32.totalorder %s26, 7
      %p381 = scmp.ne.s32.totalorder %s376, %s378
      %p382 = scmp.eq.s32.totalorder %s26, 0
      %p383 = por %p381, %p382
      %p384 = scmp.ne.s32.totalorder %s376, %s378
      %p385 = scmp.eq.s32.totalorder %s31, 7
      %p386 = por %p384, %p385
      %p387 = scmp.ne.s32.totalorder %s378, %s379
      %p388 = scmp.eq.s32.totalorder %s31, 0
      %p389 = por %p387, %p388
      %p390 = scmp.ne.s32.totalorder %s378, %s379
      %p391 = scmp.eq.s32.totalorder %s32, 7
      %p392 = por %p390, %p391
      %p394 = scmp.ne.s32.totalorder %s379, %s393
      %p395 = scmp.eq.s32.totalorder %s32, 0
      %p396 = por %p394, %p395
      %p397 = scmp.le.s32.totalorder 1, %s26
      %p398 = scmp.lt.s32.totalorder %s26, 9
      %p399 = pnand %p397, %p398
      %p400 = pneg %p399
      // Predicated region
      $region9: #{tpu_custom_call.1} parent=5 // pred_check
        _
      $region10: #{tpu_custom_call.1} parent=5 // pred_check_branch
        %402 = sbr.rel (%p399) target = $region12
      $region11: #{tpu_custom_call.1} parent=5 // pred_region
        %s403 = ssub.s32 %s26, 1
        // Predicated region
        $region13: #{tpu_custom_call.1} parent=11 // pred_check
          %p404 = pneg %p85
        $region14: #{tpu_custom_call.1} parent=11 // pred_check_branch
          %406 = sbr.rel (%p404) target = $region16
        $region15: #{tpu_custom_call.1} parent=11 // pred_region
          _
        $region16: #{tpu_custom_call.1} parent=11 // pred_fallthru
          _
        // Predicated region
        $region17: #{tpu_custom_call.1} parent=11 // pred_check
          %p407 = pneg %p132
        $region18: #{tpu_custom_call.1} parent=11 // pred_check_branch
          %409 = sbr.rel (%p407) target = $region20
        $region19: #{tpu_custom_call.1} parent=11 // pred_region
          _
        $region20: #{tpu_custom_call.1} parent=11 // pred_fallthru
          _
        // Predicated region
        $region21: #{tpu_custom_call.1} parent=11 // pred_check
          %p410 = pneg %p153
        $region22: #{tpu_custom_call.1} parent=11 // pred_check_branch
          %412 = sbr.rel (%p410) target = $region24
        $region23: #{tpu_custom_call.1} parent=11 // pred_region
          _
        $region24: #{tpu_custom_call.1} parent=11 // pred_fallthru
          _
        // Predicated region
        $region25: #{tpu_custom_call.1} parent=11 // pred_check
          %p413 = pneg %p174
        $region26: #{tpu_custom_call.1} parent=11 // pred_check_branch
          %415 = sbr.rel (%p413) target = $region28
        $region27: #{tpu_custom_call.1} parent=11 // pred_region
          _
        $region28: #{tpu_custom_call.1} parent=11 // pred_fallthru
          _
        // Predicated region
        $region29: #{tpu_custom_call.1} parent=11 // pred_check
          %p416 = pneg %p195
        $region30: #{tpu_custom_call.1} parent=11 // pred_check_branch
          %418 = sbr.rel (%p416) target = $region32
        $region31: #{tpu_custom_call.1} parent=11 // pred_region
          _
        $region32: #{tpu_custom_call.1} parent=11 // pred_fallthru
          _
        // Predicated region
        $region33: #{tpu_custom_call.1} parent=11 // pred_check
          %p419 = pneg %p216
        $region34: #{tpu_custom_call.1} parent=11 // pred_check_branch
          %421 = sbr.rel (%p419) target = $region36
        $region35: #{tpu_custom_call.1} parent=11 // pred_region
          _
        $region36: #{tpu_custom_call.1} parent=11 // pred_fallthru
          _
        // Predicated region
        $region37: #{tpu_custom_call.1} parent=11 // pred_check
          %p422 = pneg %p237
        $region38: #{tpu_custom_call.1} parent=11 // pred_check_branch
          %424 = sbr.rel (%p422) target = $region40
        $region39: #{tpu_custom_call.1} parent=11 // pred_region
          _
        $region40: #{tpu_custom_call.1} parent=11 // pred_fallthru
          _
        // Predicated region
        $region41: #{tpu_custom_call.1} parent=11 // pred_check
          %p425 = pneg %p258
        $region42: #{tpu_custom_call.1} parent=11 // pred_check_branch
          %427 = sbr.rel (%p425) target = $region44
        $region43: #{tpu_custom_call.1} parent=11 // pred_region
          _
        $region44: #{tpu_custom_call.1} parent=11 // pred_fallthru
          _
        // Predicated region
        $region45: #{tpu_custom_call.1} parent=11 // pred_check
          %p428 = pneg %p279
        $region46: #{tpu_custom_call.1} parent=11 // pred_check_branch
          %430 = sbr.rel (%p428) target = $region48
        $region47: #{tpu_custom_call.1} parent=11 // pred_region
          _
        $region48: #{tpu_custom_call.1} parent=11 // pred_fallthru
          _
        // Predicated region
        $region49: #{tpu_custom_call.1} parent=11 // pred_check
          %p431 = pneg %p300
        $region50: #{tpu_custom_call.1} parent=11 // pred_check_branch
          %433 = sbr.rel (%p431) target = $region52
        $region51: #{tpu_custom_call.1} parent=11 // pred_region
          _
        $region52: #{tpu_custom_call.1} parent=11 // pred_fallthru
          _
        // Predicated region
        $region53: #{tpu_custom_call.1} parent=11 // pred_check
          %p434 = pneg %p321
        $region54: #{tpu_custom_call.1} parent=11 // pred_check_branch
          %436 = sbr.rel (%p434) target = $region56
        $region55: #{tpu_custom_call.1} parent=11 // pred_region
          _
        $region56: #{tpu_custom_call.1} parent=11 // pred_fallthru
          _
        // Predicated region
        $region57: #{tpu_custom_call.1} parent=11 // pred_check
          %p437 = pneg %p342
        $region58: #{tpu_custom_call.1} parent=11 // pred_check_branch
          %439 = sbr.rel (%p437) target = $region60
        $region59: #{tpu_custom_call.1} parent=11 // pred_region
          _
        $region60: #{tpu_custom_call.1} parent=11 // pred_fallthru
          _
      $region12: #{tpu_custom_call.1} parent=5 // pred_fallthru
        _
      %p440 = scmp.lt.s32.totalorder %s26, 8
      // Predicated region
      $region61: #{tpu_custom_call.1} parent=5 // pred_check
        %p441 = pneg %p440
      $region62: #{tpu_custom_call.1} parent=5 // pred_check_branch
        %443 = sbr.rel (%p441) target = $region64
      $region63: #{tpu_custom_call.1} parent=5 // pred_region
        // Predicated region
        $region65: #{tpu_custom_call.1} parent=63 // pred_check
          %p444 = pneg %p58
        $region66: #{tpu_custom_call.1} parent=63 // pred_check_branch
          %446 = sbr.rel (%p444) target = $region68
        $region67: #{tpu_custom_call.1} parent=63 // pred_region
          %p447 = scmp.lt.s32.totalorder %s34, 1
          %s448 = scalar_select %p447, %s34, 1
          %s449 = smul.addr %s448, 8
          %s450 = scalar_lea.vmem %s0, %s449
        $region68: #{tpu_custom_call.1} parent=63 // pred_fallthru
          _
        // Predicated region
        $region69: #{tpu_custom_call.1} parent=63 // pred_check
          %p451 = pneg %p105
        $region70: #{tpu_custom_call.1} parent=63 // pred_check_branch
          %453 = sbr.rel (%p451) target = $region72
        $region71: #{tpu_custom_call.1} parent=63 // pred_region
          %p454 = scmp.lt.s32.totalorder %s34, 1
          %s455 = scalar_select %p454, %s34, 1
          %s456 = smul.addr %s455, 8
          %s457 = scalar_lea.vmem %s2, %s456
        $region72: #{tpu_custom_call.1} parent=63 // pred_fallthru
          _
      $region64: #{tpu_custom_call.1} parent=5 // pred_fallthru
        _
      %p458 = scmp.le.s32.totalorder 1, %s26
      %p459 = scmp.lt.s32.totalorder %s26, 9
      %p460 = pnand %p458, %p459
      %p461 = pneg %p460
      // Predicated region
      $region73: #{tpu_custom_call.1} parent=5 // pred_check
        _
      $region74: #{tpu_custom_call.1} parent=5 // pred_check_branch
        %463 = sbr.rel (%p460) target = $region76
      $region75: #{tpu_custom_call.1} parent=5 // pred_region
        %s464 = ssub.s32 %s26, 1
        %p465 = scmp.lt.s32.totalorder %s36, 1
        %s466 = scalar_select %p465, %s36, 1
        %s467 = smul.addr %s466, 8
        %s468 = scalar_lea.vmem %s0, %s467
        %p469 = pneg %p64
        %p470 = pneg %p61
        %p471 = pneg %p85
        %p472 = pneg %p82
        %p473 = scmp.lt.s32.totalorder %s36, 1
        %s474 = scalar_select %p473, %s36, 1
        %s475 = smul.addr %s474, 8
        %s476 = scalar_lea.vmem %s2, %s475
        %p477 = pneg %p111
        %p478 = pneg %p108
        %p479 = pneg %p132
        %p480 = pneg %p129
        %p481 = pneg %p153
        %p482 = pneg %p150
        %p483 = pneg %p174
        %p484 = pneg %p171
        %p485 = pneg %p195
        %p486 = pneg %p192
        %p487 = pneg %p216
        %p488 = pneg %p213
        %p489 = pneg %p237
        %p490 = pneg %p234
        %p491 = pneg %p258
        %p492 = pneg %p255
        %p493 = pneg %p279
        %p494 = pneg %p276
        %p495 = pneg %p300
        %p496 = pneg %p297
        %p497 = pneg %p321
        %p498 = pneg %p318
        %p499 = pneg %p342
        %p500 = pneg %p339
        %p501 = pneg %p368
        %p502 = pneg %p365
        %s503 = sand.u32 %s355, 1
        %s504 = scalar_lea.sflag [#allocation7], %s503
        %s505 = sand.u32 %s355, 1
        %s506 = smul.addr %s505, 8
        %s507 = scalar_lea.vmem [#allocation6], %s506
        %p508 = pneg %p389
        %p509 = pneg %p386
        %p510 = scmp.lt.s32.totalorder %s36, 1
        %s511 = scalar_select %p510, %s36, 1
        %s512 = smul.addr %s511, 8
        %s513 = scalar_lea.vmem %s0, %s512
        %p514 = scmp.lt.s32.totalorder %s36, 1
        %s515 = scalar_select %p514, %s36, 1
        %s516 = smul.addr %s515, 8
        %s517 = scalar_lea.vmem %s2, %s516
        %s518 = smul.u32 %s36, 8
        %p519 = scmp.eq.s32.totalorder %s35, 0
        // Predicated region
        $region77: #{tpu_custom_call.1} parent=75 // pred_check
          %p520 = pneg %p519
        $region78: #{tpu_custom_call.1} parent=75 // pred_check_branch
          %522 = sbr.rel (%p520) target = $region80
        $region79: #{tpu_custom_call.1} parent=75 // pred_region
          %v523 = vld [vmem:[%s513] sm:$0xff]
          %v524 = vld [vmem:[%s3] sm:$0xff]
          %v525 = vld [vmem:[%s3 + $0x8] sm:$0xff]
          %v526 = vld [vmem:[%s3 + $0x10] sm:$0xff]
          %v527 = vld [vmem:[%s3 + $0x18] sm:$0xff]
          %v528 = vld [vmem:[%s3 + $0x20] sm:$0xff]
          %v529 = vld [vmem:[%s3 + $0x28] sm:$0xff]
          %vm530 = vcmask 392192
          %v532 = vsel %vm530, %v523, 0
          %534 = vmatpush.msra.mxu0 0.0
          %535 = vmatpush.msra.mxu0 0.0
          %536 = vmatpush.msra.mxu0 0.0
          %537 = vmatpush.msra.mxu0 0.0
          %538 = vmatpush.msra.mxu0 0.0
          %539 = vmatpush.msra.mxu0 0.0
          %540 = vmatpush.msra.mxu0 0.0
          %541 = vmatpush.msra.mxu0 0.0
          %542 = vmatpush.msra.mxu0 0.0
          %543 = vmatpush.msra.mxu0 0.0
          %544 = vmatpush.msra.mxu0 %v529
          %545 = vmatpush.msra.mxu0 %v528
          %546 = vmatpush.msra.mxu0 %v527
          %547 = vmatpush.msra.mxu0 %v526
          %548 = vmatpush.msra.mxu0 %v525
          %549 = vmatpush.msra.mxu0 %v524
          %550 = vmatmul.f32.gmra.mxu0 %v532
          %v551 = vpop.f32.mrf.mxu0
          %v552 = vadd.f32 0.0, %v551
          %553 = vdwg.mxu0
          %s554 = scalar_lea.vmem [#allocation3], %s518
          %vm555 = vcmask 261120
          %556 = vst.msk [vmem:[%s554] sm:$0xff] %vm555, %v552
          %s557 = scalar_lea.vmem [#allocation2], %s518
          %558 = vst.msk [vmem:[%s557] sm:$0xff] %vm555, %v552
          %v559 = vld [vmem:[%s8] sm:$0xff]
          %v560 = vld [vmem:[%s8 + $0x8] sm:$0xff]
          %v561 = vld [vmem:[%s8 + $0x10] sm:$0xff]
          %v562 = vld [vmem:[%s8 + $0x18] sm:$0xff]
          %v564 = vsel %vm555, %v552, 0
          %566 = vmatpush.msra.mxu0 0.0
          %567 = vmatpush.msra.mxu0 0.0
          %568 = vmatpush.msra.mxu0 0.0
          %569 = vmatpush.msra.mxu0 0.0
          %570 = vmatpush.msra.mxu0 0.0
          %571 = vmatpush.msra.mxu0 0.0
          %572 = vmatpush.msra.mxu0 0.0
          %573 = vmatpush.msra.mxu0 0.0
          %574 = vmatpush.msra.mxu0 0.0
          %575 = vmatpush.msra.mxu0 0.0
          %576 = vmatpush.msra.mxu0 0.0
          %577 = vmatpush.msra.mxu0 0.0
          %578 = vmatpush.msra.mxu0 %v562
          %579 = vmatpush.msra.mxu0 %v561
          %580 = vmatpush.msra.mxu0 %v560
          %581 = vmatpush.msra.mxu0 %v559
          %582 = vmatmul.f32.gmra.mxu0 %v564
          %v583 = vpop.f32.mrf.mxu0
          %v584 = vadd.f32 0.0, %v583
          %585 = vdwg.mxu0
          %s586 = scalar_lea.vmem [#allocation4], %s518
          %vm587 = vcmask 64512
          %588 = vst.msk [vmem:[%s586] sm:$0xff] %vm587, %v584
          %p589 = scmp.eq.s32.totalorder %s36, 0
          // Predicated region
          $region81: #{tpu_custom_call.1} parent=79 // pred_check
            %p590 = pneg %p589
          $region82: #{tpu_custom_call.1} parent=79 // pred_check_branch
            %592 = sbr.rel (%p590) target = $region84
          $region83: #{tpu_custom_call.1} parent=79 // pred_region
            %v593 = vld [vmem:[%s1] sm:$0xff]
            %v594 = vld [vmem:[%s4] sm:$0xff]
            %v595 = vld [vmem:[%s4 + $0x8] sm:$0xff]
            %v596 = vld [vmem:[%s4 + $0x10] sm:$0xff]
            %v597 = vld [vmem:[%s4 + $0x18] sm:$0xff]
            %v598 = vld [vmem:[%s4 + $0x20] sm:$0xff]
            %vm599 = vcmask 326656
            %v601 = vsel %vm599, %v593, 0
            %603 = vmatpush.msra.mxu0 0.0
            %604 = vmatpush.msra.mxu0 0.0
            %605 = vmatpush.msra.mxu0 0.0
            %606 = vmatpush.msra.mxu0 0.0
            %607 = vmatpush.msra.mxu0 0.0
            %608 = vmatpush.msra.mxu0 0.0
            %609 = vmatpush.msra.mxu0 0.0
            %610 = vmatpush.msra.mxu0 0.0
            %611 = vmatpush.msra.mxu0 0.0
            %612 = vmatpush.msra.mxu0 0.0
            %613 = vmatpush.msra.mxu0 0.0
            %614 = vmatpush.msra.mxu0 %v598
            %615 = vmatpush.msra.mxu0 %v597
            %616 = vmatpush.msra.mxu0 %v596
            %617 = vmatpush.msra.mxu0 %v595
            %618 = vmatpush.msra.mxu0 %v594
            %619 = vmatmul.f32.gmra.mxu0 %v601
            %v620 = vpop.f32.mrf.mxu0
            %v621 = vadd.f32 0.0, %v620
            %622 = vdwg.mxu0
            %v623 = vld [vmem:[%s9] sm:$0xff]
            %v624 = vld [vmem:[%s9 + $0x8] sm:$0xff]
            %v625 = vld [vmem:[%s9 + $0x10] sm:$0xff]
            %v626 = vld [vmem:[%s9 + $0x18] sm:$0xff]
            %v628 = vsel %vm555, %v621, 0
            %630 = vmatpush.msra.mxu0 0.0
            %631 = vmatpush.msra.mxu0 0.0
            %632 = vmatpush.msra.mxu0 0.0
            %633 = vmatpush.msra.mxu0 0.0
            %634 = vmatpush.msra.mxu0 0.0
            %635 = vmatpush.msra.mxu0 0.0
            %636 = vmatpush.msra.mxu0 0.0
            %637 = vmatpush.msra.mxu0 0.0
            %638 = vmatpush.msra.mxu0 0.0
            %639 = vmatpush.msra.mxu0 0.0
            %640 = vmatpush.msra.mxu0 0.0
            %641 = vmatpush.msra.mxu0 0.0
            %642 = vmatpush.msra.mxu0 %v626
            %643 = vmatpush.msra.mxu0 %v625
            %644 = vmatpush.msra.mxu0 %v624
            %645 = vmatpush.msra.mxu0 %v623
            %646 = vmatmul.f32.gmra.mxu0 %v628
            %v647 = vpop.f32.mrf.mxu0
            %v648 = vadd.f32 0.0, %v647
            %649 = vdwg.mxu0
            %vm650 = vcmask 31744
            %651 = vst.msk [vmem:[#allocation5] sm:$0xff] %vm650, %v648
          $region84: #{tpu_custom_call.1} parent=79 // pred_fallthru
            _
        $region80: #{tpu_custom_call.1} parent=75 // pred_fallthru
          _
        %p652 = scmp.gt.s32.totalorder %s35, 0
        // Predicated region
        $region85: #{tpu_custom_call.1} parent=75 // pred_check
          %p653 = pneg %p652
        $region86: #{tpu_custom_call.1} parent=75 // pred_check_branch
          %655 = sbr.rel (%p653) target = $region88
        $region87: #{tpu_custom_call.1} parent=75 // pred_region
          %s656 = sadd.s32 %s35, 1
          %s657 = sand.u32 %s656, 1
          %s658 = sand.u32 %s35, 1
          %v659 = vld [vmem:[%s517] sm:$0xff]
          %vm660 = vcmp.ge.s32.totalorder %v659, 0
          %s661 = smul.u32 %s657, 16
          %s662 = scalar_lea.vmem [#allocation2], %s661
          %v663 = vld [vmem:[%s662] sm:$0xff]
          %v664 = vld [vmem:[%s662 + $0x8] sm:$0xff]
          %s665 = scalar_lea.vmem [#allocation3], %s518
          %v666 = vld [vmem:[%s665] sm:$0xff]
          %v667 = vld [vmem:[#allocation4] sm:$0xff]
          %v668 = vld [vmem:[#allocation4 + $0x8] sm:$0xff]
          %s669 = scalar_lea.vmem [#allocation4], %s518
          %v670 = vld [vmem:[%s669] sm:$0xff]
          %671 = vxpose.xlu0.b32.start [1/16] %v667, 128
          %672 = vxpose.xlu0.b32.cont [2/16] %v668, 128
          %673 = vxpose.xlu0.b32.cont [3/16] 0.0, 128
          %674 = vxpose.xlu0.b32.cont [4/16] 0.0, 128
          %675 = vxpose.xlu0.b32.cont [5/16] 0.0, 128
          %676 = vxpose.xlu0.b32.cont [6/16] 0.0, 128
          %677 = vxpose.xlu0.b32.cont [7/16] 0.0, 128
          %678 = vxpose.xlu0.b32.cont [8/16] 0.0, 128
          %679 = vxpose.xlu0.b32.cont [9/16] 0.0, 128
          %680 = vxpose.xlu0.b32.cont [10/16] 0.0, 128
          %681 = vxpose.xlu0.b32.cont [11/16] 0.0, 128
          %682 = vxpose.xlu0.b32.cont [12/16] 0.0, 128
          %683 = vxpose.xlu0.b32.cont [13/16] 0.0, 128
          %684 = vxpose.xlu0.b32.cont [14/16] 0.0, 128
          %685 = vxpose.xlu0.b32.cont [15/16] 0.0, 128
          %686 = vxpose.xlu0.b32.end [16/16] 0.0, 128
          %v687 = vpop.trf.xlu0
          %v688 = vpop.trf.xlu0
          %v689 = vpop.trf.xlu0
          %v690 = vpop.trf.xlu0
          %v691 = vpop.trf.xlu0
          %v692 = vpop.trf.xlu0
          %v693 = vpop.trf.xlu0
          %v694 = vpop.trf.xlu0
          %v695 = vpop.trf.xlu0
          %v696 = vpop.trf.xlu0
          %v697 = vpop.trf.xlu0
          %v698 = vpop.trf.xlu0
          %v699 = vpop.trf.xlu0
          %v700 = vpop.trf.xlu0
          %v701 = vpop.trf.xlu0
          %v702 = vpop.trf.xlu0
          %v703 = vld [vmem:[#allocation5] sm:$0xff]
          %vm704 = vcmp.eq.s32.totalorder %v659, 0
          %v705 = vsel %vm704, 1, 0
          %v706 = vcvt.s32.f32 %v705
          %vm707 = vcmp.eq.s32.totalorder %v659, 1
          %v708 = vsel %vm707, 1, 0
          %v709 = vcvt.s32.f32 %v708
          %vm710 = vcmp.eq.s32.totalorder %v659, 2
          %v711 = vsel %vm710, 1, 0
          %v712 = vcvt.s32.f32 %v711
          %vm713 = vcmp.eq.s32.totalorder %v659, 3
          %v714 = vsel %vm713, 1, 0
          %v715 = vcvt.s32.f32 %v714
          %vm716 = vcmp.eq.s32.totalorder %v659, 4
          %v717 = vsel %vm716, 1, 0
          %v718 = vcvt.s32.f32 %v717
          %vm719 = vcmp.eq.s32.totalorder %v659, 5
          %v720 = vsel %vm719, 1, 0
          %v721 = vcvt.s32.f32 %v720
          %vm722 = vcmp.eq.s32.totalorder %v659, 6
          %v723 = vsel %vm722, 1, 0
          %v724 = vcvt.s32.f32 %v723
          %vm725 = vcmp.eq.s32.totalorder %v659, 7
          %v726 = vsel %vm725, 1, 0
          %v727 = vcvt.s32.f32 %v726
          %s729 = vtos %v703
          %v730 = vstv %s729
          %v732 = vmul.f32 %v706, %v730
          %v733 = vrot.slane %v703, 1
          %s734 = vtos %v733
          %v735 = vstv %s734
          %v737 = vmul.f32 %v709, %v735
          %v738 = vadd.f32 %v732, %v737
          %v739 = vrot.slane %v703, 2
          %s740 = vtos %v739
          %v741 = vstv %s740
          %v743 = vmul.f32 %v712, %v741
          %v744 = vadd.f32 %v738, %v743
          %v745 = vrot.slane %v703, 3
          %s746 = vtos %v745
          %v747 = vstv %s746
          %v749 = vmul.f32 %v715, %v747
          %v750 = vadd.f32 %v744, %v749
          %v751 = vrot.slane %v703, 4
          %s752 = vtos %v751
          %v753 = vstv %s752
          %v755 = vmul.f32 %v718, %v753
          %v756 = vadd.f32 %v750, %v755
          %v757 = vrot.slane %v703, 5
          %s758 = vtos %v757
          %v759 = vstv %s758
          %v761 = vmul.f32 %v721, %v759
          %v762 = vadd.f32 %v756, %v761
          %v763 = vrot.slane %v703, 6
          %s764 = vtos %v763
          %v765 = vstv %s764
          %v767 = vmul.f32 %v724, %v765
          %v768 = vadd.f32 %v762, %v767
          %v769 = vrot.slane %v703, 7
          %s770 = vtos %v769
          %v771 = vstv %s770
          %v773 = vmul.f32 %v727, %v771
          %v774 = vadd.f32 %v768, %v773
          %v775 = vperm.slane %v687, 0
          %777 = vset.pattern.permute.xlu0 4
          %778 = vperm.xlu0 %777, %v670
          %v779 = vpop.permute.xlu0 %778
          %v781 = vadd.f32 %v775, %v779
          %v782 = vadd.f32 %v781, %v774
          %vm783 = vcmp.ge.f32.partialorder %v782, 0.0
          %v784 = vmul.f32 %v782, 0.2
          %v785 = vsel %vm783, %v782, %v784
          %v786 = vsel %vm660, %v785, -1e+09
          %vm787 = vcmask 130048
          %v788 = vsel %vm787, %v786, -inf
          %789 = vmax.xlane.f32.xlu0 %v788
          %v790 = vpop.xlane.xlu0 %789
          %v791 = vsub.f32 %v786, %v790
          %v792 = vmul.f32 %v791, 1.442695
          %v793 = vpow.pop %v792
          %v794 = vsel %vm660, %v793, 0.0
          %v795 = vsel %vm787, %v794, 0.0
          %796 = vadd.xlane.f32.xlu0 %v795
          %v797 = vpop.xlane.xlu0 %796
          %vm798 = vcmp.gt.f32.partialorder %v797, 0.0
          %v799 = vsel %vm798, %v797, 1.0
          %v800 = vrcp.pop %v799
          %v801 = vmul.f32 %v799, %v800
          %v802 = vsub.f32 1.0, %v801
          %v803 = vmul.f32 %v800, %v802
          %v804 = vadd.f32 %v800, %v803
          %vm805 = vweird.f32 %v799
          %vm806 = vweird.f32 %v800
          %vm807 = vmor %vm805, %vm806
          %v808 = vsel %vm807, %v800, %v804
          %v809 = vand.u32 2147483647, %v799
          %vm810 = vcmp.eq.f32.partialorder %v809, 8.507059e+37
          %v811 = vand.u32 %v799, 2147483648
          %v812 = vor.u32 1.1754944e-38, %v811
          %v813 = vsel %vm810, %v812, %v808
          %v814 = vmul.f32 %v794, %v813
          %v816 = vsel %vm787, %v814, 0
          %818 = vmatpush.msra.mxu0 0.0
          %819 = vmatpush.msra.mxu0 0.0
          %820 = vmatpush.msra.mxu0 0.0
          %821 = vmatpush.msra.mxu0 0.0
          %822 = vmatpush.msra.mxu0 0.0
          %823 = vmatpush.msra.mxu0 0.0
          %824 = vmatpush.msra.mxu0 0.0
          %825 = vmatpush.msra.mxu0 0.0
          %826 = vmatpush.msra.mxu0 0.0
          %827 = vmatpush.msra.mxu0 0.0
          %828 = vmatpush.msra.mxu0 0.0
          %829 = vmatpush.msra.mxu0 0.0
          %830 = vmatpush.msra.mxu0 0.0
          %831 = vmatpush.msra.mxu0 0.0
          %832 = vmatpush.msra.mxu0 %v664
          %833 = vmatpush.msra.mxu0 %v663
          %834 = vmatmul.f32.gmra.mxu0 %v816
          %v835 = vpop.f32.mrf.mxu0
          %v836 = vadd.f32 0.0, %v835
          %837 = vdwg.mxu0
          %v838 = vmul.f32 %v836, 0.85
          %v839 = vmul.f32 %v666, 0.15
          %v840 = vadd.f32 %v838, %v839
          %841 = vrot.lane.b32.xlu0 %v703, 127
          %v842 = vpop.permute.xlu0 %841
          %s843 = vtos %v842
          %v844 = vstv %s843
          %v846 = vmul.f32 %v706, %v844
          %847 = vrot.lane.b32.xlu0 %v733, 127
          %v848 = vpop.permute.xlu0 %847
          %s849 = vtos %v848
          %v850 = vstv %s849
          %v852 = vmul.f32 %v709, %v850
          %v853 = vadd.f32 %v846, %v852
          %854 = vrot.lane.b32.xlu0 %v739, 127
          %v855 = vpop.permute.xlu0 %854
          %s856 = vtos %v855
          %v857 = vstv %s856
          %v859 = vmul.f32 %v712, %v857
          %v860 = vadd.f32 %v853, %v859
          %861 = vrot.lane.b32.xlu0 %v745, 127
          %v862 = vpop.permute.xlu0 %861
          %s863 = vtos %v862
          %v864 = vstv %s863
          %v866 = vmul.f32 %v715, %v864
          %v867 = vadd.f32 %v860, %v866
          %868 = vrot.lane.b32.xlu0 %v751, 127
          %v869 = vpop.permute.xlu0 %868
          %s870 = vtos %v869
          %v871 = vstv %s870
          %v873 = vmul.f32 %v718, %v871
          %v874 = vadd.f32 %v867, %v873
          %875 = vrot.lane.b32.xlu0 %v757, 127
          %v876 = vpop.permute.xlu0 %875
          %s877 = vtos %v876
          %v878 = vstv %s877
          %v880 = vmul.f32 %v721, %v878
          %v881 = vadd.f32 %v874, %v880
          %882 = vrot.lane.b32.xlu0 %v763, 127
          %v883 = vpop.permute.xlu0 %882
          %s884 = vtos %v883
          %v885 = vstv %s884
          %v887 = vmul.f32 %v724, %v885
          %v888 = vadd.f32 %v881, %v887
          %889 = vrot.lane.b32.xlu0 %v769, 127
          %v890 = vpop.permute.xlu0 %889
          %s891 = vtos %v890
          %v892 = vstv %s891
          %v894 = vmul.f32 %v727, %v892
          %v895 = vadd.f32 %v888, %v894
          %v896 = vperm.slane %v687, 1
          %897 = vset.pattern.permute.xlu0 5
          %898 = vperm.xlu0 %897, %v670
          %v899 = vpop.permute.xlu0 %898
          %v901 = vadd.f32 %v896, %v899
          %v902 = vadd.f32 %v901, %v895
          %vm903 = vcmp.ge.f32.partialorder %v902, 0.0
          %v904 = vmul.f32 %v902, 0.2
          %v905 = vsel %vm903, %v902, %v904
          %v906 = vsel %vm660, %v905, -1e+09
          %v907 = vsel %vm787, %v906, -inf
          %908 = vmax.xlane.f32.xlu0 %v907
          %v909 = vpop.xlane.xlu0 %908
          %v910 = vsub.f32 %v906, %v909
          %v911 = vmul.f32 %v910, 1.442695
          %v912 = vpow.pop %v911
          %v913 = vsel %vm660, %v912, 0.0
          %v914 = vsel %vm787, %v913, 0.0
          %915 = vadd.xlane.f32.xlu0 %v914
          %v916 = vpop.xlane.xlu0 %915
          %vm917 = vcmp.gt.f32.partialorder %v916, 0.0
          %v918 = vsel %vm917, %v916, 1.0
          %v919 = vrcp.pop %v918
          %v920 = vmul.f32 %v918, %v919
          %v921 = vsub.f32 1.0, %v920
          %v922 = vmul.f32 %v919, %v921
          %v923 = vadd.f32 %v919, %v922
          %vm924 = vweird.f32 %v918
          %vm925 = vweird.f32 %v919
          %vm926 = vmor %vm924, %vm925
          %v927 = vsel %vm926, %v919, %v923
          %v928 = vand.u32 2147483647, %v918
          %vm929 = vcmp.eq.f32.partialorder %v928, 8.507059e+37
          %v930 = vand.u32 %v918, 2147483648
          %v931 = vor.u32 1.1754944e-38, %v930
          %v932 = vsel %vm929, %v931, %v927
          %v933 = vmul.f32 %v913, %v932
          %936 = vrot.lane.b32.xlu0 %v663, 120
          %v937 = vpop.permute.xlu0 %936
          %938 = vrot.lane.b32.xlu0 %v664, 120
          %v939 = vpop.permute.xlu0 %938
          %v943 = vsel %vm787, %v933, 0
          %945 = vmatpush.msra.mxu0 0.0
          %946 = vmatpush.msra.mxu0 0.0
          %947 = vmatpush.msra.mxu0 0.0
          %948 = vmatpush.msra.mxu0 0.0
          %949 = vmatpush.msra.mxu0 0.0
          %950 = vmatpush.msra.mxu0 0.0
          %951 = vmatpush.msra.mxu0 0.0
          %952 = vmatpush.msra.mxu0 0.0
          %953 = vmatpush.msra.mxu0 0.0
          %954 = vmatpush.msra.mxu0 0.0
          %955 = vmatpush.msra.mxu0 0.0
          %956 = vmatpush.msra.mxu0 0.0
          %957 = vmatpush.msra.mxu0 0.0
          %958 = vmatpush.msra.mxu0 0.0
          %959 = vmatpush.msra.mxu0 %v939
          %960 = vmatpush.msra.mxu0 %v937
          %961 = vmatmul.f32.gmra.mxu0 %v943
          %v962 = vpop.f32.mrf.mxu0
          %v963 = vadd.f32 0.0, %v962
          %964 = vdwg.mxu0
          %v965 = vmul.f32 %v963, 0.85
          %967 = vrot.lane.b32.xlu0 %v839, 120
          %v968 = vpop.permute.xlu0 %967
          %v970 = vadd.f32 %v965, %v968
          %971 = vrot.lane.b32.xlu0 %v703, 126
          %v972 = vpop.permute.xlu0 %971
          %s973 = vtos %v972
          %v974 = vstv %s973
          %v976 = vmul.f32 %v706, %v974
          %977 = vrot.lane.b32.xlu0 %v733, 126
          %v978 = vpop.permute.xlu0 %977
          %s979 = vtos %v978
          %v980 = vstv %s979
          %v982 = vmul.f32 %v709, %v980
          %v983 = vadd.f32 %v976, %v982
          %984 = vrot.lane.b32.xlu0 %v739, 126
          %v985 = vpop.permute.xlu0 %984
          %s986 = vtos %v985
          %v987 = vstv %s986
          %v989 = vmul.f32 %v712, %v987
          %v990 = vadd.f32 %v983, %v989
          %991 = vrot.lane.b32.xlu0 %v745, 126
          %v992 = vpop.permute.xlu0 %991
          %s993 = vtos %v992
          %v994 = vstv %s993
          %v996 = vmul.f32 %v715, %v994
          %v997 = vadd.f32 %v990, %v996
          %998 = vrot.lane.b32.xlu0 %v751, 126
          %v999 = vpop.permute.xlu0 %998
          %s1000 = vtos %v999
          %v1001 = vstv %s1000
          %v1003 = vmul.f32 %v718, %v1001
          %v1004 = vadd.f32 %v997, %v1003
          %1005 = vrot.lane.b32.xlu0 %v757, 126
          %v1006 = vpop.permute.xlu0 %1005
          %s1007 = vtos %v1006
          %v1008 = vstv %s1007
          %v1010 = vmul.f32 %v721, %v1008
          %v1011 = vadd.f32 %v1004, %v1010
          %1012 = vrot.lane.b32.xlu0 %v763, 126
          %v1013 = vpop.permute.xlu0 %1012
          %s1014 = vtos %v1013
          %v1015 = vstv %s1014
          %v1017 = vmul.f32 %v724, %v1015
          %v1018 = vadd.f32 %v1011, %v1017
          %1019 = vrot.lane.b32.xlu0 %v769, 126
          %v1020 = vpop.permute.xlu0 %1019
          %s1021 = vtos %v1020
          %v1022 = vstv %s1021
          %v1024 = vmul.f32 %v727, %v1022
          %v1025 = vadd.f32 %v1018, %v1024
          %v1026 = vperm.slane %v687, 2
          %1027 = vset.pattern.permute.xlu0 6
          %1028 = vperm.xlu0 %1027, %v670
          %v1029 = vpop.permute.xlu0 %1028
          %v1031 = vadd.f32 %v1026, %v1029
          %v1032 = vadd.f32 %v1031, %v1025
          %vm1033 = vcmp.ge.f32.partialorder %v1032, 0.0
          %v1034 = vmul.f32 %v1032, 0.2
          %v1035 = vsel %vm1033, %v1032, %v1034
          %v1036 = vsel %vm660, %v1035, -1e+09
          %v1037 = vsel %vm787, %v1036, -inf
          %1038 = vmax.xlane.f32.xlu0 %v1037
          %v1039 = vpop.xlane.xlu0 %1038
          %v1040 = vsub.f32 %v1036, %v1039
          %v1041 = vmul.f32 %v1040, 1.442695
          %v1042 = vpow.pop %v1041
          %v1043 = vsel %vm660, %v1042, 0.0
          %v1044 = vsel %vm787, %v1043, 0.0
          %1045 = vadd.xlane.f32.xlu0 %v1044
          %v1046 = vpop.xlane.xlu0 %1045
          %vm1047 = vcmp.gt.f32.partialorder %v1046, 0.0
          %v1048 = vsel %vm1047, %v1046, 1.0
          %v1049 = vrcp.pop %v1048
          %v1050 = vmul.f32 %v1048, %v1049
          %v1051 = vsub.f32 1.0, %v1050
          %v1052 = vmul.f32 %v1049, %v1051
          %v1053 = vadd.f32 %v1049, %v1052
          %vm1054 = vweird.f32 %v1048
          %vm1055 = vweird.f32 %v1049
          %vm1056 = vmor %vm1054, %vm1055
          %v1057 = vsel %vm1056, %v1049, %v1053
          %v1058 = vand.u32 2147483647, %v1048
          %vm1059 = vcmp.eq.f32.partialorder %v1058, 8.507059e+37
          %v1060 = vand.u32 %v1048, 2147483648
          %v1061 = vor.u32 1.1754944e-38, %v1060
          %v1062 = vsel %vm1059, %v1061, %v1057
          %v1063 = vmul.f32 %v1043, %v1062
          %1064 = vrot.lane.b32.xlu0 %v663, 112
          %v1065 = vpop.permute.xlu0 %1064
          %1066 = vrot.lane.b32.xlu0 %v664, 112
          %v1067 = vpop.permute.xlu0 %1066
          %v1071 = vsel %vm787, %v1063, 0
          %1073 = vmatpush.msra.mxu0 0.0
          %1074 = vmatpush.msra.mxu0 0.0
          %1075 = vmatpush.msra.mxu0 0.0
          %1076 = vmatpush.msra.mxu0 0.0
          %1077 = vmatpush.msra.mxu0 0.0
          %1078 = vmatpush.msra.mxu0 0.0
          %1079 = vmatpush.msra.mxu0 0.0
          %1080 = vmatpush.msra.mxu0 0.0
          %1081 = vmatpush.msra.mxu0 0.0
          %1082 = vmatpush.msra.mxu0 0.0
          %1083 = vmatpush.msra.mxu0 0.0
          %1084 = vmatpush.msra.mxu0 0.0
          %1085 = vmatpush.msra.mxu0 0.0
          %1086 = vmatpush.msra.mxu0 0.0
          %1087 = vmatpush.msra.mxu0 %v1067
          %1088 = vmatpush.msra.mxu0 %v1065
          %1089 = vmatmul.f32.gmra.mxu0 %v1071
          %v1090 = vpop.f32.mrf.mxu0
          %v1091 = vadd.f32 0.0, %v1090
          %1092 = vdwg.mxu0
          %v1093 = vmul.f32 %v1091, 0.85
          %1094 = vrot.lane.b32.xlu0 %v839, 112
          %v1095 = vpop.permute.xlu0 %1094
          %v1097 = vadd.f32 %v1093, %v1095
          %1098 = vrot.lane.b32.xlu0 %v703, 125
          %v1099 = vpop.permute.xlu0 %1098
          %s1100 = vtos %v1099
          %v1101 = vstv %s1100
          %v1103 = vmul.f32 %v706, %v1101
          %1104 = vrot.lane.b32.xlu0 %v733, 125
          %v1105 = vpop.permute.xlu0 %1104
          %s1106 = vtos %v1105
          %v1107 = vstv %s1106
          %v1109 = vmul.f32 %v709, %v1107
          %v1110 = vadd.f32 %v1103, %v1109
          %1111 = vrot.lane.b32.xlu0 %v739, 125
          %v1112 = vpop.permute.xlu0 %1111
          %s1113 = vtos %v1112
          %v1114 = vstv %s1113
          %v1116 = vmul.f32 %v712, %v1114
          %v1117 = vadd.f32 %v1110, %v1116
          %1118 = vrot.lane.b32.xlu0 %v745, 125
          %v1119 = vpop.permute.xlu0 %1118
          %s1120 = vtos %v1119
          %v1121 = vstv %s1120
          %v1123 = vmul.f32 %v715, %v1121
          %v1124 = vadd.f32 %v1117, %v1123
          %1125 = vrot.lane.b32.xlu0 %v751, 125
          %v1126 = vpop.permute.xlu0 %1125
          %s1127 = vtos %v1126
          %v1128 = vstv %s1127
          %v1130 = vmul.f32 %v718, %v1128
          %v1131 = vadd.f32 %v1124, %v1130
          %1132 = vrot.lane.b32.xlu0 %v757, 125
          %v1133 = vpop.permute.xlu0 %1132
          %s1134 = vtos %v1133
          %v1135 = vstv %s1134
          %v1137 = vmul.f32 %v721, %v1135
          %v1138 = vadd.f32 %v1131, %v1137
          %1139 = vrot.lane.b32.xlu0 %v763, 125
          %v1140 = vpop.permute.xlu0 %1139
          %s1141 = vtos %v1140
          %v1142 = vstv %s1141
          %v1144 = vmul.f32 %v724, %v1142
          %v1145 = vadd.f32 %v1138, %v1144
          %1146 = vrot.lane.b32.xlu0 %v769, 125
          %v1147 = vpop.permute.xlu0 %1146
          %s1148 = vtos %v1147
          %v1149 = vstv %s1148
          %v1151 = vmul.f32 %v727, %v1149
          %v1152 = vadd.f32 %v1145, %v1151
          %v1153 = vperm.slane %v687, 3
          %1154 = vset.pattern.permute.xlu0 7
          %1155 = vperm.xlu0 %1154, %v670
          %v1156 = vpop.permute.xlu0 %1155
          %v1158 = vadd.f32 %v1153, %v1156
          %v1159 = vadd.f32 %v1158, %v1152
          %vm1160 = vcmp.ge.f32.partialorder %v1159, 0.0
          %v1161 = vmul.f32 %v1159, 0.2
          %v1162 = vsel %vm1160, %v1159, %v1161
          %v1163 = vsel %vm660, %v1162, -1e+09
          %v1164 = vsel %vm787, %v1163, -inf
          %1165 = vmax.xlane.f32.xlu0 %v1164
          %v1166 = vpop.xlane.xlu0 %1165
          %v1167 = vsub.f32 %v1163, %v1166
          %v1168 = vmul.f32 %v1167, 1.442695
          %v1169 = vpow.pop %v1168
          %v1170 = vsel %vm660, %v1169, 0.0
          %v1171 = vsel %vm787, %v1170, 0.0
          %1172 = vadd.xlane.f32.xlu0 %v1171
          %v1173 = vpop.xlane.xlu0 %1172
          %vm1174 = vcmp.gt.f32.partialorder %v1173, 0.0
          %v1175 = vsel %vm1174, %v1173, 1.0
          %v1176 = vrcp.pop %v1175
          %v1177 = vmul.f32 %v1175, %v1176
          %v1178 = vsub.f32 1.0, %v1177
          %v1179 = vmul.f32 %v1176, %v1178
          %v1180 = vadd.f32 %v1176, %v1179
          %vm1181 = vweird.f32 %v1175
          %vm1182 = vweird.f32 %v1176
          %vm1183 = vmor %vm1181, %vm1182
          %v1184 = vsel %vm1183, %v1176, %v1180
          %v1185 = vand.u32 2147483647, %v1175
          %vm1186 = vcmp.eq.f32.partialorder %v1185, 8.507059e+37
          %v1187 = vand.u32 %v1175, 2147483648
          %v1188 = vor.u32 1.1754944e-38, %v1187
          %v1189 = vsel %vm1186, %v1188, %v1184
          %v1190 = vmul.f32 %v1170, %v1189
          %1191 = vrot.lane.b32.xlu0 %v663, 104
          %v1192 = vpop.permute.xlu0 %1191
          %1193 = vrot.lane.b32.xlu0 %v664, 104
          %v1194 = vpop.permute.xlu0 %1193
          %v1198 = vsel %vm787, %v1190, 0
          %1200 = vmatpush.msra.mxu0 0.0
          %1201 = vmatpush.msra.mxu0 0.0
          %1202 = vmatpush.msra.mxu0 0.0
          %1203 = vmatpush.msra.mxu0 0.0
          %1204 = vmatpush.msra.mxu0 0.0
          %1205 = vmatpush.msra.mxu0 0.0
          %1206 = vmatpush.msra.mxu0 0.0
          %1207 = vmatpush.msra.mxu0 0.0
          %1208 = vmatpush.msra.mxu0 0.0
          %1209 = vmatpush.msra.mxu0 0.0
          %1210 = vmatpush.msra.mxu0 0.0
          %1211 = vmatpush.msra.mxu0 0.0
          %1212 = vmatpush.msra.mxu0 0.0
          %1213 = vmatpush.msra.mxu0 0.0
          %1214 = vmatpush.msra.mxu0 %v1194
          %1215 = vmatpush.msra.mxu0 %v1192
          %1216 = vmatmul.f32.gmra.mxu0 %v1198
          %v1217 = vpop.f32.mrf.mxu0
          %v1218 = vadd.f32 0.0, %v1217
          %1219 = vdwg.mxu0
          %v1220 = vmul.f32 %v1218, 0.85
          %1221 = vrot.lane.b32.xlu0 %v839, 104
          %v1222 = vpop.permute.xlu0 %1221
          %v1224 = vadd.f32 %v1220, %v1222
          %1226 = vrot.lane.b32.xlu0 %v970, 8
          %v1227 = vpop.permute.xlu0 %1226
          %1230 = vrot.lane.b32.xlu0 %v1097, 16
          %v1231 = vpop.permute.xlu0 %1230
          %1234 = vrot.lane.b32.xlu0 %v1224, 24
          %v1235 = vpop.permute.xlu0 %1234
          %vm1237 = vcmask 64512
          %v1238 = vsel %vm1237, %v840, %v1227
          %v1239 = vsel %vm787, %v1238, %v1231
          %vm1240 = vcmask 195584
          %v1241 = vsel %vm1240, %v1239, %v1235
          %s1242 = smul.u32 %s658, 16
          %s1243 = sadd.s32 %s518, %s1242
          %s1244 = scalar_lea.vmem [#allocation2], %s1243
          %vm1245 = vcmask 261120
          %1246 = vst.msk [vmem:[%s1244] sm:$0xff] %vm1245, %v1241
          %p1247 = scmp.eq.s32.totalorder %s35, 3
          // Predicated region
          $region89: #{tpu_custom_call.1} parent=87 // pred_check
            %p1248 = pneg %p1247
          $region90: #{tpu_custom_call.1} parent=87 // pred_check_branch
            %1250 = sbr.rel (%p1248) target = $region92
          $region91: #{tpu_custom_call.1} parent=87 // pred_region
            %v1251 = vld [vmem:[%s513] sm:$0xff]
            %v1252 = vld [vmem:[%s5] sm:$0xff]
            %v1253 = vld [vmem:[%s5 + $0x8] sm:$0xff]
            %v1254 = vld [vmem:[%s5 + $0x10] sm:$0xff]
            %v1255 = vld [vmem:[%s5 + $0x18] sm:$0xff]
            %v1257 = vsel %vm1245, %v1241, 0
            %1259 = vmatpush.msra.mxu0 0.0
            %1260 = vmatpush.msra.mxu0 0.0
            %1261 = vmatpush.msra.mxu0 0.0
            %1262 = vmatpush.msra.mxu0 0.0
            %1263 = vmatpush.msra.mxu0 0.0
            %1264 = vmatpush.msra.mxu0 0.0
            %1265 = vmatpush.msra.mxu0 0.0
            %1266 = vmatpush.msra.mxu0 0.0
            %1267 = vmatpush.msra.mxu0 0.0
            %1268 = vmatpush.msra.mxu0 0.0
            %1269 = vmatpush.msra.mxu0 0.0
            %1270 = vmatpush.msra.mxu0 0.0
            %1271 = vmatpush.msra.mxu0 %v1255
            %1272 = vmatpush.msra.mxu0 %v1254
            %1273 = vmatpush.msra.mxu0 %v1253
            %1274 = vmatpush.msra.mxu0 %v1252
            %1275 = vmatmul.f32.gmra.mxu0 %v1257
            %v1276 = vpop.f32.mrf.mxu0
            %v1277 = vadd.f32 0.0, %v1276
            %1278 = vdwg.mxu0
            %v1279 = vld [vmem:[%s6] sm:$0xff]
            %v1280 = vld [vmem:[%s6 + $0x8] sm:$0xff]
            %v1281 = vld [vmem:[%s6 + $0x10] sm:$0xff]
            %v1282 = vld [vmem:[%s6 + $0x18] sm:$0xff]
            %v1283 = vld [vmem:[%s6 + $0x20] sm:$0xff]
            %v1284 = vld [vmem:[%s6 + $0x28] sm:$0xff]
            %v1285 = vmul.f32 %v1277, 0.5
            %vm1286 = vcmask 392192
            %v1288 = vsel %vm1286, %v1251, 0
            %1290 = vmatpush.msra.mxu0 0.0
            %1291 = vmatpush.msra.mxu0 0.0
            %1292 = vmatpush.msra.mxu0 0.0
            %1293 = vmatpush.msra.mxu0 0.0
            %1294 = vmatpush.msra.mxu0 0.0
            %1295 = vmatpush.msra.mxu0 0.0
            %1296 = vmatpush.msra.mxu0 0.0
            %1297 = vmatpush.msra.mxu0 0.0
            %1298 = vmatpush.msra.mxu0 0.0
            %1299 = vmatpush.msra.mxu0 0.0
            %1300 = vmatpush.msra.mxu0 %v1284
            %1301 = vmatpush.msra.mxu0 %v1283
            %1302 = vmatpush.msra.mxu0 %v1282
            %1303 = vmatpush.msra.mxu0 %v1281
            %1304 = vmatpush.msra.mxu0 %v1280
            %1305 = vmatpush.msra.mxu0 %v1279
            %1306 = vmatmul.f32.gmra.mxu0 %v1288
            %v1307 = vpop.f32.mrf.mxu0
            %v1308 = vadd.f32 %v1285, %v1307
            %1309 = vdwg.mxu0
            %v1310 = vld [vmem:[%s10] sm:$0xff]
            %v1311 = vld [vmem:[%s10 + $0x8] sm:$0xff]
            %v1312 = vld [vmem:[%s10 + $0x10] sm:$0xff]
            %v1313 = vld [vmem:[%s10 + $0x18] sm:$0xff]
            %v1314 = vld [vmem:[%s11] sm:$0x1]
            %v1316 = vperm.slane %v1314, 0
            %v1319 = vsel %vm1245, %v1308, 0
            %1321 = vmatpush.msra.mxu0 0.0
            %1322 = vmatpush.msra.mxu0 0.0
            %1323 = vmatpush.msra.mxu0 0.0
            %1324 = vmatpush.msra.mxu0 0.0
            %1325 = vmatpush.msra.mxu0 0.0
            %1326 = vmatpush.msra.mxu0 0.0
            %1327 = vmatpush.msra.mxu0 0.0
            %1328 = vmatpush.msra.mxu0 0.0
            %1329 = vmatpush.msra.mxu0 0.0
            %1330 = vmatpush.msra.mxu0 0.0
            %1331 = vmatpush.msra.mxu0 0.0
            %1332 = vmatpush.msra.mxu0 0.0
            %1333 = vmatpush.msra.mxu0 %v1313
            %1334 = vmatpush.msra.mxu0 %v1312
            %1335 = vmatpush.msra.mxu0 %v1311
            %1336 = vmatpush.msra.mxu0 %v1310
            %1337 = vmatmul.f32.gmra.mxu0 %v1319
            %v1338 = vpop.f32.mrf.mxu0
            %v1339 = vadd.f32 %v1316, %v1338
            %1340 = vdwg.mxu0
            %v1341 = vmax.f32 %v1339, 0.0
            %v1342 = vld [vmem:[%s12] sm:$0xff]
            %v1343 = vld [vmem:[%s12 + $0x8] sm:$0xff]
            %v1344 = vld [vmem:[%s12 + $0x10] sm:$0xff]
            %v1345 = vld [vmem:[%s12 + $0x18] sm:$0xff]
            %v1346 = vld [vmem:[%s12 + $0x20] sm:$0xff]
            %v1347 = vld [vmem:[%s12 + $0x28] sm:$0xff]
            %v1348 = vld [vmem:[%s12 + $0x30] sm:$0xff]
            %v1349 = vld [vmem:[%s12 + $0x38] sm:$0xff]
            %v1350 = vld [vmem:[%s12 + $0x40] sm:$0xff]
            %v1351 = vld [vmem:[%s12 + $0x48] sm:$0xff]
            %v1352 = vld [vmem:[%s12 + $0x50] sm:$0xff]
            %v1353 = vld [vmem:[%s12 + $0x58] sm:$0xff]
            %v1354 = vld [vmem:[%s12 + $0x60] sm:$0xff]
            %v1355 = vld [vmem:[%s12 + $0x68] sm:$0xff]
            %v1356 = vld [vmem:[%s12 + $0x70] sm:$0xff]
            %v1357 = vld [vmem:[%s12 + $0x78] sm:$0xff]
            %v1358 = vld [vmem:[%s13] sm:$0x1]
            %v1360 = vperm.slane %v1358, 0
            %1362 = vmatpush.msra.mxu0 %v1357
            %1363 = vmatpush.msra.mxu0 %v1356
            %1364 = vmatpush.msra.mxu0 %v1355
            %1365 = vmatpush.msra.mxu0 %v1354
            %1366 = vmatpush.msra.mxu0 %v1353
            %1367 = vmatpush.msra.mxu0 %v1352
            %1368 = vmatpush.msra.mxu0 %v1351
            %1369 = vmatpush.msra.mxu0 %v1350
            %1370 = vmatpush.msra.mxu0 %v1349
            %1371 = vmatpush.msra.mxu0 %v1348
            %1372 = vmatpush.msra.mxu0 %v1347
            %1373 = vmatpush.msra.mxu0 %v1346
            %1374 = vmatpush.msra.mxu0 %v1345
            %1375 = vmatpush.msra.mxu0 %v1344
            %1376 = vmatpush.msra.mxu0 %v1343
            %1377 = vmatpush.msra.mxu0 %v1342
            %1378 = vmatmul.f32.gmra.mxu0 %v1341
            %v1379 = vpop.f32.mrf.mxu0
            %v1380 = vadd.f32 %v1360, %v1379
            %1381 = vdwg.mxu0
            %v1382 = vmul.f32 %v1380, 0.25
            %v1383 = vadd.f32 %v1308, %v1382
            %1384 = vst.msk [vmem:[%s507] sm:$0xff] %vm1245, %v1383
          $region92: #{tpu_custom_call.1} parent=87 // pred_fallthru
            _
        $region88: #{tpu_custom_call.1} parent=75 // pred_fallthru
          _
        %p1385 = scmp.eq.s32.totalorder %s35, 3
        %p1386 = scmp.eq.s32.totalorder %s36, 1
        %p1387 = pnand %p1385, %p1386
        %p1388 = pneg %p1387
        // Predicated region
        $region93: #{tpu_custom_call.1} parent=75 // pred_check
          _
        $region94: #{tpu_custom_call.1} parent=75 // pred_check_branch
          %1390 = sbr.rel (%p1387) target = $region96
        $region95: #{tpu_custom_call.1} parent=75 // pred_region
          %v1391 = vld [vmem:[%s1] sm:$0xff]
          %v1392 = vld [vmem:[%s4] sm:$0xff]
          %v1393 = vld [vmem:[%s4 + $0x8] sm:$0xff]
          %v1394 = vld [vmem:[%s4 + $0x10] sm:$0xff]
          %v1395 = vld [vmem:[%s4 + $0x18] sm:$0xff]
          %v1396 = vld [vmem:[%s4 + $0x20] sm:$0xff]
          %vm1397 = vcmask 326656
          %v1399 = vsel %vm1397, %v1391, 0
          %1401 = vmatpush.msra.mxu0 0.0
          %1402 = vmatpush.msra.mxu0 0.0
          %1403 = vmatpush.msra.mxu0 0.0
          %1404 = vmatpush.msra.mxu0 0.0
          %1405 = vmatpush.msra.mxu0 0.0
          %1406 = vmatpush.msra.mxu0 0.0
          %1407 = vmatpush.msra.mxu0 0.0
          %1408 = vmatpush.msra.mxu0 0.0
          %1409 = vmatpush.msra.mxu0 0.0
          %1410 = vmatpush.msra.mxu0 0.0
          %1411 = vmatpush.msra.mxu0 0.0
          %1412 = vmatpush.msra.mxu0 %v1396
          %1413 = vmatpush.msra.mxu0 %v1395
          %1414 = vmatpush.msra.mxu0 %v1394
          %1415 = vmatpush.msra.mxu0 %v1393
          %1416 = vmatpush.msra.mxu0 %v1392
          %1417 = vmatmul.f32.gmra.mxu0 %v1399
          %v1418 = vpop.f32.mrf.mxu0
          %v1419 = vadd.f32 0.0, %v1418
          %1420 = vdwg.mxu0
          %v1421 = vld [vmem:[%s7] sm:$0xff]
          %v1422 = vld [vmem:[%s7 + $0x8] sm:$0xff]
          %v1423 = vld [vmem:[%s7 + $0x10] sm:$0xff]
          %v1424 = vld [vmem:[%s7 + $0x18] sm:$0xff]
          %v1425 = vld [vmem:[%s7 + $0x20] sm:$0xff]
          %v1426 = vmul.f32 %v1419, 0.5
          %1427 = vmatpush.msra.mxu0 0.0
          %1428 = vmatpush.msra.mxu0 0.0
          %1429 = vmatpush.msra.mxu0 0.0
          %1430 = vmatpush.msra.mxu0 0.0
          %1431 = vmatpush.msra.mxu0 0.0
          %1432 = vmatpush.msra.mxu0 0.0
          %1433 = vmatpush.msra.mxu0 0.0
          %1434 = vmatpush.msra.mxu0 0.0
          %1435 = vmatpush.msra.mxu0 0.0
          %1436 = vmatpush.msra.mxu0 0.0
          %1437 = vmatpush.msra.mxu0 0.0
          %1438 = vmatpush.msra.mxu0 %v1425
          %1439 = vmatpush.msra.mxu0 %v1424
          %1440 = vmatpush.msra.mxu0 %v1423
          %1441 = vmatpush.msra.mxu0 %v1422
          %1442 = vmatpush.msra.mxu0 %v1421
          %1443 = vmatmul.f32.gmra.mxu0 %v1399
          %v1444 = vpop.f32.mrf.mxu0
          %v1445 = vadd.f32 %v1426, %v1444
          %1446 = vdwg.mxu0
          %vm1447 = vcmask 261120
          %1448 = vst.msk [vmem:[#allocation8] sm:$0xff] %vm1447, %v1445
        $region96: #{tpu_custom_call.1} parent=75 // pred_fallthru
          _
        %s1449 = sand.u32 %s355, 1
        %s1450 = scalar_lea.sflag [#allocation7], %s1449
        %s1451 = sand.u32 %s355, 1
        %s1452 = smul.addr %s1451, 8
        %s1453 = scalar_lea.vmem [#allocation6], %s1452
        // Predicated region
        $region97: #{tpu_custom_call.1} parent=75 // pred_check
          %p1454 = pneg %p365
        $region98: #{tpu_custom_call.1} parent=75 // pred_check_branch
          %1456 = sbr.rel (%p1454) target = $region100
        $region99: #{tpu_custom_call.1} parent=75 // pred_region
          %1458 = vsyncadd %s1450, 0
          %s1459 = smul.addr %s36, 8
          %s1460 = scalar_lea.hbm %s14, %s1459
          %s1462 = sshll.u32 %s1453, 4
          %s1463 = int_to_ptr.vmem [resolvable:$true] %s1462
          %s1464 = sshll.u32 %s1460, 4
          %s1465 = int_to_ptr.hbm [resolvable:$true] %s1464
          %1467 = dma.vmem_to_hbm [thread:$0]  %s1463, 128, %s1465, %s1450
        $region100: #{tpu_custom_call.1} parent=75 // pred_fallthru
          _
        // Predicated region
        $region101: #{tpu_custom_call.1} parent=75 // pred_check
          %p1468 = pneg %p386
        $region102: #{tpu_custom_call.1} parent=75 // pred_check_branch
          %1470 = sbr.rel (%p1468) target = $region104
        $region103: #{tpu_custom_call.1} parent=75 // pred_region
          %1472 = vsyncadd [#allocation9], 0
          %s1474 = sshll.u32 [#allocation8], 4
          %s1475 = int_to_ptr.vmem [resolvable:$true] %s1474
          %s1476 = sshll.u32 %s15, 4
          %s1477 = int_to_ptr.hbm [resolvable:$true] %s1476
          %1479 = dma.vmem_to_hbm [thread:$0]  %s1475, 128, %s1477, [#allocation9]
        $region104: #{tpu_custom_call.1} parent=75 // pred_fallthru
          _
        // Predicated region
        $region105: #{tpu_custom_call.1} parent=75 // pred_check
          %p1480 = pneg %p386
        $region106: #{tpu_custom_call.1} parent=75 // pred_check_branch
          %1482 = sbr.rel (%p1480) target = $region108
        $region107: #{tpu_custom_call.1} parent=75 // pred_region
          %1484 = dma.done [#allocation9], 128
        $region108: #{tpu_custom_call.1} parent=75 // pred_fallthru
          _
      $region76: #{tpu_custom_call.1} parent=5 // pred_fallthru
        _
      %p1485 = scmp.le.s32.totalorder 2, %s26
      // Predicated region
      $region109: #{tpu_custom_call.1} parent=5 // pred_check
        %p1486 = pneg %p1485
      $region110: #{tpu_custom_call.1} parent=5 // pred_check_branch
        %1488 = sbr.rel (%p1486) target = $region112
      $region111: #{tpu_custom_call.1} parent=5 // pred_region
        %s1489 = ssub.s32 %s26, 2
        // Predicated region
        $region113: #{tpu_custom_call.1} parent=111 // pred_check
          %p1490 = pneg %p371
        $region114: #{tpu_custom_call.1} parent=111 // pred_check_branch
          %1492 = sbr.rel (%p1490) target = $region116
        $region115: #{tpu_custom_call.1} parent=111 // pred_region
          %s1493 = sand.u32 %s356, 1
          %s1494 = scalar_lea.sflag [#allocation7], %s1493
          %s1495 = sand.u32 %s356, 1
          %s1496 = smul.addr %s1495, 8
          %s1497 = scalar_lea.vmem [#allocation6], %s1496
          %1499 = dma.done %s1494, 128
        $region116: #{tpu_custom_call.1} parent=111 // pred_fallthru
          _
      $region112: #{tpu_custom_call.1} parent=5 // pred_fallthru
        _
    $region6: #{tpu_custom_call.1} parent=1 // loop_footer
      %s30 = sadd.s32 1, %s26
    $region7: #{tpu_custom_call.1} parent=1 // loop_footer_branch
      %25 = sbr.rel target = $region3
    $region8: #{tpu_custom_call.1} parent=1 // loop_exit
      _
    %1500 = vsyncpa [#allocation7], 1
    %s1501 = scalar_lea.sflag [#allocation7], 1
    %1502 = vsyncpa %s1501, 1
    %1503 = vsyncpa [#allocation9], 1

</llo_original>
